<compile_context>
chip_gen: v7x
topology: tpu7x:2x2x1
jax: 0.10.0
libtpu: 0.0.40
codegen_flags: <defaults>
</compile_context>

<pallas_src>
import functools

import jax
import jax.numpy as jnp
from jax.experimental import pallas as pl
from jax.experimental.pallas import tpu as pltpu


# ---------------------------------------------------------------------------
# Tiling helper
# ---------------------------------------------------------------------------
def _pick_tile(dim, target):
    """Use `target` if it evenly tiles `dim`, otherwise fall back to the full dim.

    Full-dim blocks are always legal (the (8,128) divisibility rule only applies
    to partial tiles)."""
    return target if dim % target == 0 else dim


# ---------------------------------------------------------------------------
# Tiled linear / matmul kernel (shared by the fused QKV proj and unifyheads)
# ---------------------------------------------------------------------------
def _matmul_body(x_ref, w_ref, b_ref, o_ref, acc_ref, compute_dtype):
    @pl.when(pl.program_id(2) == 0)
    def _():
        acc_ref[...] = jnp.zeros_like(acc_ref)

    acc_ref[...] += jnp.dot(
        x_ref[...].astype(compute_dtype),
        w_ref[...].astype(compute_dtype),
        preferred_element_type=jnp.float32,
    )

    @pl.when(pl.program_id(2) == pl.num_programs(2) - 1)
    def _():
        acc = acc_ref[...]
        if b_ref is not None:  # static (trace-time) branch
            acc = acc + b_ref[...].astype(jnp.float32)
        o_ref[...] = acc.astype(o_ref.dtype)


def _matmul_kernel(x_ref, w_ref, o_ref, acc_ref, *, compute_dtype):
    _matmul_body(x_ref, w_ref, None, o_ref, acc_ref, compute_dtype)


def _matmul_bias_kernel(x_ref, w_ref, b_ref, o_ref, acc_ref, *, compute_dtype):
    _matmul_body(x_ref, w_ref, b_ref, o_ref, acc_ref, compute_dtype)


def matmul(x2d, w, bias=None, *, tm=256, tn=256, tk=256,
           compute_dtype=jnp.float32):
    """y = x2d @ w (+ bias).  x2d: (M, K), w: (K, N), bias: (N,) or None.

    Tiled over (M, N, K) with a VMEM f32 accumulator; M/N tile axes are
    'parallel' (megacore shardable), K is the 'arbitrary' reduction axis.
    Tile targets are 256-aligned (good for the 256-wide MXU on v6e/v7x and a
    multiple of 128 for v5e)."""
    M, K = x2d.shape
    Kw, N = w.shape
    assert K == Kw

    tm = _pick_tile(M, tm)
    tn = _pick_tile(N, tn)
    tk = _pick_tile(K, tk)
    grid = (M // tm, N // tn, K // tk)

    x_spec = pl.BlockSpec((tm, tk), lambda i, j, kk: (i, kk))
    w_spec = pl.BlockSpec((tk, tn), lambda i, j, kk: (kk, j))
    o_spec = pl.BlockSpec((tm, tn), lambda i, j, kk: (i, j))
    scratch = [pltpu.VMEM((tm, tn), jnp.float32)]
    cparams = pltpu.CompilerParams(
        dimension_semantics=("parallel", "parallel", "arbitrary"))

    if bias is None:
        return pl.pallas_call(
            functools.partial(_matmul_kernel, compute_dtype=compute_dtype),
            out_shape=jax.ShapeDtypeStruct((M, N), x2d.dtype),
            grid=grid,
            in_specs=[x_spec, w_spec],
            out_specs=o_spec,
            scratch_shapes=scratch,
            compiler_params=cparams,
        )(x2d, w)

    bias2d = bias.reshape(1, N)
    b_spec = pl.BlockSpec((1, tn), lambda i, j, kk: (0, j))
    return pl.pallas_call(
        functools.partial(_matmul_bias_kernel, compute_dtype=compute_dtype),
        out_shape=jax.ShapeDtypeStruct((M, N), x2d.dtype),
        grid=grid,
        in_specs=[x_spec, w_spec, b_spec],
        out_specs=o_spec,
        scratch_shapes=scratch,
        compiler_params=cparams,
    )(x2d, w, bias2d)


# ---------------------------------------------------------------------------
# Flash-style multi-head attention kernel
#   grid = (batch, q-tile, kv-tile); one block = all `heads` of a batch element
# ---------------------------------------------------------------------------
def _attn_kernel(q_ref, k_ref, v_ref, o_ref, m_sc, l_sc, acc_sc, *,
                 scale, compute_dtype):
    kv = pl.program_id(2)

    @pl.when(kv == 0)
    def _():
        m_sc[...] = jnp.full_like(m_sc, -jnp.inf)
        l_sc[...] = jnp.zeros_like(l_sc)
        acc_sc[...] = jnp.zeros_like(acc_sc)

    # Fold 1/sqrt(k) into Q (O(H*Tq*s) instead of scaling the Tq*Tkv logits).
    q = q_ref[...].astype(jnp.float32) * scale
    k = k_ref[...]
    # Batched-over-heads Q @ K^T with contracting last dims: no in-kernel
    # transpose, MXU consumes K directly.
    s_logits = jnp.einsum(
        "hqd,hkd->hqk",
        q.astype(compute_dtype), k.astype(compute_dtype),
        preferred_element_type=jnp.float32)

    m_prev = m_sc[...]
    m_new = jnp.maximum(m_prev, jnp.max(s_logits, axis=-1, keepdims=True))
    alpha = jnp.exp(m_prev - m_new)
    p = jnp.exp(s_logits - m_new)

    l_sc[...] = alpha * l_sc[...] + jnp.sum(p, axis=-1, keepdims=True)
    acc_sc[...] = alpha * acc_sc[...] + jnp.einsum(
        "hqk,hkd->hqd",
        p.astype(compute_dtype), v_ref[...].astype(compute_dtype),
        preferred_element_type=jnp.float32)
    m_sc[...] = m_new

    @pl.when(kv == pl.num_programs(2) - 1)
    def _():
        # One reciprocal per (head, query) row + broadcast multiply
        # instead of Tq*Tkv element-wise divides.
        inv_l = pl.reciprocal(l_sc[...], approx=False)
        o_ref[...] = (acc_sc[...] * inv_l).astype(o_ref.dtype)


def attention_bh(q_bh, k_bh, v_bh, scale, heads, *, tq=128, tkv=128,
                 compute_dtype=jnp.float32):
    """Scaled-dot-product attention over a (B*H, T, S) batch of heads."""
    BH, T, S = q_bh.shape
    B = BH // heads
    tq = _pick_tile(T, tq)
    tkv = _pick_tile(T, tkv)
    grid = (B, T // tq, T // tkv)

    q_spec = pl.BlockSpec((heads, tq, S), lambda bi, qi, ki: (bi, qi, 0))
    kv_spec = pl.BlockSpec((heads, tkv, S), lambda bi, qi, ki: (bi, ki, 0))
    o_spec = pl.BlockSpec((heads, tq, S), lambda bi, qi, ki: (bi, qi, 0))

    return pl.pallas_call(
        functools.partial(_attn_kernel, scale=scale,
                          compute_dtype=compute_dtype),
        out_shape=jax.ShapeDtypeStruct((BH, T, S), q_bh.dtype),
        grid=grid,
        in_specs=[q_spec, kv_spec, kv_spec],
        out_specs=o_spec,
        scratch_shapes=[
            pltpu.VMEM((heads, tq, 1), jnp.float32),   # running max m
            pltpu.VMEM((heads, tq, 1), jnp.float32),   # running sum l
            pltpu.VMEM((heads, tq, S), jnp.float32),   # output accumulator
        ],
        compiler_params=pltpu.CompilerParams(
            dimension_semantics=("parallel", "parallel", "arbitrary")),
    )(q_bh, k_bh, v_bh)


# ---------------------------------------------------------------------------
# SelfAttention forward (Pallas matmuls + exact replica of the module's glue)
# ---------------------------------------------------------------------------
def self_attention_forward(x, params, heads, *, compute_dtype=jnp.float32):
    b, t, k = x.shape
    s = k // heads
    x2d = x.reshape(b * t, k)

    # Fused Q/K/V projection: one kernel, x read from HBM once.
    # nn.Linear(k, k, bias=False): y = x @ W^T  ->  stack the three W^T.
    w_qkv = jnp.concatenate(
        [params["wq"].T, params["wk"].T, params["wv"].T], axis=1)  # (k, 3k)
    qkv = matmul(x2d, w_qkv, compute_dtype=compute_dtype).reshape(b, t, 3 * k)
    queries = qkv[:, :, :k]
    keys = qkv[:, :, k:2 * k]
    values = qkv[:, :, 2 * k:]

    def split_heads(z):
        # Exact replica of the PyTorch module:
        #   z.transpose(1, 2).contiguous().view(b * heads, t, s)
        # (This interleaves feature/token indices, so it cannot be expressed
        #  as a rectangular BlockSpec slice; it stays as an XLA transpose.)
        return jnp.transpose(z, (0, 2, 1)).reshape(b * heads, t, s)

    qh = split_heads(queries)
    kh = split_heads(keys)
    vh = split_heads(values)

    scale = 1.0 / (float(k) ** 0.5)             # module scales by 1/sqrt(k)
    out = attention_bh(qh, kh, vh, scale, heads,
                       compute_dtype=compute_dtype)  # (b*heads, t, s)

    # .view(b, heads, t, s).transpose(1, 2).contiguous().view(b, t, s*heads)
    out = out.reshape(b, heads, t, s)
    out = jnp.transpose(out, (0, 2, 1, 3)).reshape(b, t, heads * s)

    # unifyheads: nn.Linear(k, k) with bias
    y = matmul(out.reshape(b * t, k), params["wu"].T, params["bu"],
               compute_dtype=compute_dtype)
    return y.reshape(b, t, k)


# ---------------------------------------------------------------------------
# Pure-JAX reference (mirrors the PyTorch forward) for correctness checking
# ---------------------------------------------------------------------------
def reference_forward(x, params, heads):
    b, t, k = x.shape
    s = k // heads
    q = x @ params["wq"].T
    kk = x @ params["wk"].T
    v = x @ params["wv"].T

    def split_heads(z):
        return jnp.transpose(z, (0, 2, 1)).reshape(b * heads, t, s)

    qh, kh, vh = split_heads(q), split_heads(kk), split_heads(v)
    dot = jnp.einsum("bts,bus->btu", qh, kh) / (float(k) ** 0.5)
    dot = jax.nn.softmax(dot, axis=2)
    out = jnp.einsum("btu,bus->bts", dot, vh)
    out = out.reshape(b, heads, t, s)
    out = jnp.transpose(out, (0, 2, 1, 3)).reshape(b, t, heads * s)
    return out @ params["wu"].T + params["bu"]


# ---------------------------------------------------------------------------
if __name__ == "__main__":
    b, t, k, heads = 2, 8, 32, 4

    key = jax.random.PRNGKey(0)
    k0, k1, k2, k3, k4, k5 = jax.random.split(key, 6)
    bound = 1.0 / (k ** 0.5)  # matches nn.Linear default init range
    params = {
        "wq": jax.random.uniform(k0, (k, k), jnp.float32, -bound, bound),
        "wk": jax.random.uniform(k1, (k, k), jnp.float32, -bound, bound),
        "wv": jax.random.uniform(k2, (k, k), jnp.float32, -bound, bound),
        "wu": jax.random.uniform(k3, (k, k), jnp.float32, -bound, bound),
        "bu": jax.random.uniform(k4, (k,), jnp.float32, -bound, bound),
    }
    x = jax.random.normal(k5, (b, t, k), jnp.float32)

    fwd = jax.jit(functools.partial(self_attention_forward, heads=heads))
    y = jax.block_until_ready(fwd(x, params))

    y_ref = reference_forward(x, params, heads)
    assert y.shape == (b, t, k)
    assert jnp.allclose(y, y_ref, atol=1e-4, rtol=1e-4), "mismatch vs reference"

    print("KERNEL_OK")
</pallas_src>

<mosaic_0001>
module attributes {stable_mosaic.version = 11 : i64} {
  func.func @_matmul_kernel(%arg0: i32, %arg1: i32, %arg2: i32, %arg3: memref<16x32xf32, #tpu.memory_space<vmem>>, %arg4: memref<32x96xf32, #tpu.memory_space<vmem>>, %arg5: memref<16x96xf32, #tpu.memory_space<vmem>>, %arg6: memref<16x96xf32, #tpu.memory_space<vmem>>) attributes {dimension_semantics = [#tpu.dimension_semantics<parallel>, #tpu.dimension_semantics<parallel>, #tpu.dimension_semantics<arbitrary>], iteration_bounds = array<i64: 1, 1, 1>, scalar_prefetch = 0 : i64, scratch_operands = 1 : i64, tpu.core_type = #tpu.core_type<tc>, window_params = [{transform_indices = @transform_0, window_bounds = array<i64: 16, 32>}, {transform_indices = @transform_1, window_bounds = array<i64: 32, 96>}, {transform_indices = @transform_2, window_bounds = array<i64: 16, 96>}]} {
    %c0_i32 = arith.constant 0 : i32
    %0 = arith.cmpi eq, %arg2, %c0_i32 : i32
    %1 = arith.extui %0 : i1 to i32
    %c0_i32_0 = arith.constant 0 : i32
    %2 = arith.cmpi ne, %1, %c0_i32_0 : i32
    scf.if %2 {
      %cst_10 = arith.constant 0.000000e+00 : f32
      %12 = vector.broadcast %cst_10 : f32 to vector<16x96xf32>
      %c0_11 = arith.constant 0 : index
      %c0_12 = arith.constant 0 : index
      %13 = vector.load %arg6[%c0_11, %c0_12] : memref<16x96xf32, #tpu.memory_space<vmem>>, vector<16x96xf32>
      tpu.vector_store %arg6[%c0_11, %c0_12], %12 {strides = array<i32>} : memref<16x96xf32, #tpu.memory_space<vmem>>, vector<16x96xf32>,
    } else {
    }
    %c0 = arith.constant 0 : index
    %c0_1 = arith.constant 0 : index
    %3 = vector.load %arg6[%c0, %c0_1] : memref<16x96xf32, #tpu.memory_space<vmem>>, vector<16x96xf32>
    %c0_2 = arith.constant 0 : index
    %c0_3 = arith.constant 0 : index
    %4 = vector.load %arg3[%c0_2, %c0_3] : memref<16x32xf32, #tpu.memory_space<vmem>>, vector<16x32xf32>
    %c0_4 = arith.constant 0 : index
    %c0_5 = arith.constant 0 : index
    %5 = vector.load %arg4[%c0_4, %c0_5] : memref<32x96xf32, #tpu.memory_space<vmem>>, vector<32x96xf32>
    %cst = arith.constant dense<0.000000e+00> : vector<16x96xf32>
    %6 = tpu.matmul %4, %5, %cst {dimension_numbers = #tpu.dot_dimension_numbers<[1], [0], [0], [1], [0, 0, 1, 1], [], []>} : vector<16x32xf32>, vector<32x96xf32>, vector<16x96xf32> -> vector<16x96xf32>
    %7 = arith.addf %3, %6 : vector<16x96xf32>
    %c0_6 = arith.constant 0 : index
    %c0_7 = arith.constant 0 : index
    %8 = vector.load %arg6[%c0_6, %c0_7] : memref<16x96xf32, #tpu.memory_space<vmem>>, vector<16x96xf32>
    tpu.vector_store %arg6[%c0_6, %c0_7], %7 {strides = array<i32>} : memref<16x96xf32, #tpu.memory_space<vmem>>, vector<16x96xf32>,
    %c0_i32_8 = arith.constant 0 : i32
    %9 = arith.cmpi eq, %arg2, %c0_i32_8 : i32
    %10 = arith.extui %9 : i1 to i32
    %c0_i32_9 = arith.constant 0 : i32
    %11 = arith.cmpi ne, %10, %c0_i32_9 : i32
    scf.if %11 {
      %c0_10 = arith.constant 0 : index
      %c0_11 = arith.constant 0 : index
      %12 = vector.load %arg6[%c0_10, %c0_11] : memref<16x96xf32, #tpu.memory_space<vmem>>, vector<16x96xf32>
      %c0_12 = arith.constant 0 : index
      %c0_13 = arith.constant 0 : index
      %13 = vector.load %arg5[%c0_12, %c0_13] : memref<16x96xf32, #tpu.memory_space<vmem>>, vector<16x96xf32>
      tpu.vector_store %arg5[%c0_12, %c0_13], %12 {strides = array<i32>} : memref<16x96xf32, #tpu.memory_space<vmem>>, vector<16x96xf32>,
    } else {
    }
    return
  }
  func.func @transform_0(%arg0: i32, %arg1: i32, %arg2: i32) -> (i32, i32) {
    %c0_i32 = arith.constant 0 : i32
    return %arg0, %arg2 : i32, i32
  }
  func.func @transform_1(%arg0: i32, %arg1: i32, %arg2: i32) -> (i32, i32) {
    %c0_i32 = arith.constant 0 : i32
    return %arg2, %arg1 : i32, i32
  }
  func.func @transform_2(%arg0: i32, %arg1: i32, %arg2: i32) -> (i32, i32) {
    %c0_i32 = arith.constant 0 : i32
    return %arg0, %arg1 : i32, i32
  }
}

module attributes {stable_mosaic.version = 11 : i64} {
  func.func @_attn_kernel(%arg0: i32, %arg1: i32, %arg2: i32, %arg3: memref<4x8x8xf32, #tpu.memory_space<vmem>>, %arg4: memref<4x8x8xf32, #tpu.memory_space<vmem>>, %arg5: memref<4x8x8xf32, #tpu.memory_space<vmem>>, %arg6: memref<4x8x8xf32, #tpu.memory_space<vmem>>, %arg7: memref<4x8x1xf32, #tpu.memory_space<vmem>>, %arg8: memref<4x8x1xf32, #tpu.memory_space<vmem>>, %arg9: memref<4x8x8xf32, #tpu.memory_space<vmem>>) attributes {dimension_semantics = [#tpu.dimension_semantics<parallel>, #tpu.dimension_semantics<parallel>, #tpu.dimension_semantics<arbitrary>], iteration_bounds = array<i64: 2, 1, 1>, scalar_prefetch = 0 : i64, scratch_operands = 3 : i64, tpu.core_type = #tpu.core_type<tc>, window_params = [{transform_indices = @transform_0, window_bounds = array<i64: 4, 8, 8>}, {transform_indices = @transform_1, window_bounds = array<i64: 4, 8, 8>}, {transform_indices = @transform_2, window_bounds = array<i64: 4, 8, 8>}, {transform_indices = @transform_3, window_bounds = array<i64: 4, 8, 8>}]} {
    %c0_i32 = arith.constant 0 : i32
    %0 = arith.cmpi eq, %arg2, %c0_i32 : i32
    %1 = arith.extui %0 : i1 to i32
    %c0_i32_0 = arith.constant 0 : i32
    %2 = arith.cmpi ne, %1, %c0_i32_0 : i32
    scf.if %2 {
      %cst_33 = arith.constant 0xFF800000 : f32
      %34 = vector.broadcast %cst_33 : f32 to vector<4x8x1xf32>
      %c0_34 = arith.constant 0 : index
      %c0_35 = arith.constant 0 : index
      %c0_36 = arith.constant 0 : index
      %35 = vector.load %arg7[%c0_34, %c0_35, %c0_36] : memref<4x8x1xf32, #tpu.memory_space<vmem>>, vector<4x8x1xf32>
      tpu.vector_store %arg7[%c0_34, %c0_35, %c0_36], %34 {strides = array<i32>} : memref<4x8x1xf32, #tpu.memory_space<vmem>>, vector<4x8x1xf32>,
      %cst_37 = arith.constant 0.000000e+00 : f32
      %36 = vector.broadcast %cst_37 : f32 to vector<4x8x1xf32>
      %c0_38 = arith.constant 0 : index
      %c0_39 = arith.constant 0 : index
      %c0_40 = arith.constant 0 : index
      %37 = vector.load %arg8[%c0_38, %c0_39, %c0_40] : memref<4x8x1xf32, #tpu.memory_space<vmem>>, vector<4x8x1xf32>
      tpu.vector_store %arg8[%c0_38, %c0_39, %c0_40], %36 {strides = array<i32>} : memref<4x8x1xf32, #tpu.memory_space<vmem>>, vector<4x8x1xf32>,
      %cst_41 = arith.constant 0.000000e+00 : f32
      %38 = vector.broadcast %cst_41 : f32 to vector<4x8x8xf32>
      %c0_42 = arith.constant 0 : index
      %c0_43 = arith.constant 0 : index
      %c0_44 = arith.constant 0 : index
      %39 = vector.load %arg9[%c0_42, %c0_43, %c0_44] : memref<4x8x8xf32, #tpu.memory_space<vmem>>, vector<4x8x8xf32>
      tpu.vector_store %arg9[%c0_42, %c0_43, %c0_44], %38 {strides = array<i32>} : memref<4x8x8xf32, #tpu.memory_space<vmem>>, vector<4x8x8xf32>,
    } else {
    }
    %c0 = arith.constant 0 : index
    %c0_1 = arith.constant 0 : index
    %c0_2 = arith.constant 0 : index
    %3 = vector.load %arg3[%c0, %c0_1, %c0_2] : memref<4x8x8xf32, #tpu.memory_space<vmem>>, vector<4x8x8xf32>
    %cst = arith.constant 0.176776692 : f32
    %4 = vector.broadcast %cst : f32 to vector<4x8x8xf32>
    %5 = arith.mulf %3, %4 : vector<4x8x8xf32>
    %c0_3 = arith.constant 0 : index
    %c0_4 = arith.constant 0 : index
    %c0_5 = arith.constant 0 : index
    %6 = vector.load %arg4[%c0_3, %c0_4, %c0_5] : memref<4x8x8xf32, #tpu.memory_space<vmem>>, vector<4x8x8xf32>
    "tpu.trace_start"() <{level = 10 : i32, message = "hqd,hkd->hqk"}> : () -> ()
    %cst_6 = arith.constant dense<0.000000e+00> : vector<4x8x8xf32>
    %7 = tpu.matmul %5, %6, %cst_6 {dimension_numbers = #tpu.dot_dimension_numbers<[2], [2], [1], [1], [0, 0, 0, 1, 1, 1], [0], [0]>} : vector<4x8x8xf32>, vector<4x8x8xf32>, vector<4x8x8xf32> -> vector<4x8x8xf32>
    "tpu.trace_stop"() : () -> ()
    %c0_7 = arith.constant 0 : index
    %c0_8 = arith.constant 0 : index
    %c0_9 = arith.constant 0 : index
    %8 = vector.load %arg7[%c0_7, %c0_8, %c0_9] : memref<4x8x1xf32, #tpu.memory_space<vmem>>, vector<4x8x1xf32>
    %cst_10 = arith.constant dense<0xFF800000> : vector<4x8xf32>
    %9 = vector.multi_reduction <maximumf>, %7, %cst_10 [2] : vector<4x8x8xf32> to vector<4x8xf32>
    %10 = vector.shape_cast %9 : vector<4x8xf32> to vector<4x8x1xf32>
    %11 = arith.maximumf %8, %10 : vector<4x8x1xf32>
    %12 = arith.subf %8, %11 : vector<4x8x1xf32>
    %13 = math.exp %12 : vector<4x8x1xf32>
    %14 = vector.broadcast %11 : vector<4x8x1xf32> to vector<4x8x8xf32>
    %15 = arith.subf %7, %14 : vector<4x8x8xf32>
    %16 = math.exp %15 : vector<4x8x8xf32>
    %c0_11 = arith.constant 0 : index
    %c0_12 = arith.constant 0 : index
    %c0_13 = arith.constant 0 : index
    %17 = vector.load %arg8[%c0_11, %c0_12, %c0_13] : memref<4x8x1xf32, #tpu.memory_space<vmem>>, vector<4x8x1xf32>
    %18 = arith.mulf %13, %17 : vector<4x8x1xf32>
    %cst_14 = arith.constant dense<0.000000e+00> : vector<4x8xf32>
    %19 = vector.multi_reduction <add>, %16, %cst_14 [2] : vector<4x8x8xf32> to vector<4x8xf32>
    %20 = vector.shape_cast %19 : vector<4x8xf32> to vector<4x8x1xf32>
    %21 = arith.addf %18, %20 : vector<4x8x1xf32>
    %c0_15 = arith.constant 0 : index
    %c0_16 = arith.constant 0 : index
    %c0_17 = arith.constant 0 : index
    %22 = vector.load %arg8[%c0_15, %c0_16, %c0_17] : memref<4x8x1xf32, #tpu.memory_space<vmem>>, vector<4x8x1xf32>
    tpu.vector_store %arg8[%c0_15, %c0_16, %c0_17], %21 {strides = array<i32>} : memref<4x8x1xf32, #tpu.memory_space<vmem>>, vector<4x8x1xf32>,
    %c0_18 = arith.constant 0 : index
    %c0_19 = arith.constant 0 : index
    %c0_20 = arith.constant 0 : index
    %23 = vector.load %arg9[%c0_18, %c0_19, %c0_20] : memref<4x8x8xf32, #tpu.memory_space<vmem>>, vector<4x8x8xf32>
    %24 = vector.broadcast %13 : vector<4x8x1xf32> to vector<4x8x8xf32>
    %25 = arith.mulf %24, %23 : vector<4x8x8xf32>
    %c0_21 = arith.constant 0 : index
    %c0_22 = arith.constant 0 : index
    %c0_23 = arith.constant 0 : index
    %26 = vector.load %arg5[%c0_21, %c0_22, %c0_23] : memref<4x8x8xf32, #tpu.memory_space<vmem>>, vector<4x8x8xf32>
    "tpu.trace_start"() <{level = 10 : i32, message = "hqk,hkd->hqd"}> : () -> ()
    %cst_24 = arith.constant dense<0.000000e+00> : vector<4x8x8xf32>
    %27 = tpu.matmul %16, %26, %cst_24 {dimension_numbers = #tpu.dot_dimension_numbers<[2], [1], [1], [2], [0, 0, 0, 1, 1, 2], [0], [0]>} : vector<4x8x8xf32>, vector<4x8x8xf32>, vector<4x8x8xf32> -> vector<4x8x8xf32>
    "tpu.trace_stop"() : () -> ()
    %28 = arith.addf %25, %27 : vector<4x8x8xf32>
    %c0_25 = arith.constant 0 : index
    %c0_26 = arith.constant 0 : index
    %c0_27 = arith.constant 0 : index
    %29 = vector.load %arg9[%c0_25, %c0_26, %c0_27] : memref<4x8x8xf32, #tpu.memory_space<vmem>>, vector<4x8x8xf32>
    tpu.vector_store %arg9[%c0_25, %c0_26, %c0_27], %28 {strides = array<i32>} : memref<4x8x8xf32, #tpu.memory_space<vmem>>, vector<4x8x8xf32>,
    %c0_28 = arith.constant 0 : index
    %c0_29 = arith.constant 0 : index
    %c0_30 = arith.constant 0 : index
    %30 = vector.load %arg7[%c0_28, %c0_29, %c0_30] : memref<4x8x1xf32, #tpu.memory_space<vmem>>, vector<4x8x1xf32>
    tpu.vector_store %arg7[%c0_28, %c0_29, %c0_30], %11 {strides = array<i32>} : memref<4x8x1xf32, #tpu.memory_space<vmem>>, vector<4x8x1xf32>,
    %c0_i32_31 = arith.constant 0 : i32
    %31 = arith.cmpi eq, %arg2, %c0_i32_31 : i32
    %32 = arith.extui %31 : i1 to i32
    %c0_i32_32 = arith.constant 0 : i32
    %33 = arith.cmpi ne, %32, %c0_i32_32 : i32
    scf.if %33 {
      %c0_33 = arith.constant 0 : index
      %c0_34 = arith.constant 0 : index
      %c0_35 = arith.constant 0 : index
      %34 = vector.load %arg8[%c0_33, %c0_34, %c0_35] : memref<4x8x1xf32, #tpu.memory_space<vmem>>, vector<4x8x1xf32>
      %35 = tpu.reciprocal %34 : vector<4x8x1xf32> -> vector<4x8x1xf32>
      %c0_36 = arith.constant 0 : index
      %c0_37 = arith.constant 0 : index
      %c0_38 = arith.constant 0 : index
      %36 = vector.load %arg9[%c0_36, %c0_37, %c0_38] : memref<4x8x8xf32, #tpu.memory_space<vmem>>, vector<4x8x8xf32>
      %37 = vector.broadcast %35 : vector<4x8x1xf32> to vector<4x8x8xf32>
      %38 = arith.mulf %36, %37 : vector<4x8x8xf32>
      %c0_39 = arith.constant 0 : index
      %c0_40 = arith.constant 0 : index
      %c0_41 = arith.constant 0 : index
      %39 = vector.load %arg6[%c0_39, %c0_40, %c0_41] : memref<4x8x8xf32, #tpu.memory_space<vmem>>, vector<4x8x8xf32>
      tpu.vector_store %arg6[%c0_39, %c0_40, %c0_41], %38 {strides = array<i32>} : memref<4x8x8xf32, #tpu.memory_space<vmem>>, vector<4x8x8xf32>,
    } else {
    }
    return
  }
  func.func @transform_0(%arg0: i32, %arg1: i32, %arg2: i32) -> (i32, i32, i32) {
    %c0_i32 = arith.constant 0 : i32
    %c0_i32_0 = arith.constant 0 : i32
    return %arg0, %arg1, %c0_i32 : i32, i32, i32
  }
  func.func @transform_1(%arg0: i32, %arg1: i32, %arg2: i32) -> (i32, i32, i32) {
    %c0_i32 = arith.constant 0 : i32
    %c0_i32_0 = arith.constant 0 : i32
    return %arg0, %arg2, %c0_i32 : i32, i32, i32
  }
  func.func @transform_2(%arg0: i32, %arg1: i32, %arg2: i32) -> (i32, i32, i32) {
    %c0_i32 = arith.constant 0 : i32
    %c0_i32_0 = arith.constant 0 : i32
    return %arg0, %arg2, %c0_i32 : i32, i32, i32
  }
  func.func @transform_3(%arg0: i32, %arg1: i32, %arg2: i32) -> (i32, i32, i32) {
    %c0_i32 = arith.constant 0 : i32
    %c0_i32_0 = arith.constant 0 : i32
    return %arg0, %arg1, %c0_i32 : i32, i32, i32
  }
}

module attributes {stable_mosaic.version = 11 : i64} {
  func.func @_matmul_bias_kernel(%arg0: i32, %arg1: i32, %arg2: i32, %arg3: memref<16x32xf32, #tpu.memory_space<vmem>>, %arg4: memref<32x32xf32, #tpu.memory_space<vmem>>, %arg5: memref<1x32xf32, #tpu.memory_space<vmem>>, %arg6: memref<16x32xf32, #tpu.memory_space<vmem>>, %arg7: memref<16x32xf32, #tpu.memory_space<vmem>>) attributes {dimension_semantics = [#tpu.dimension_semantics<parallel>, #tpu.dimension_semantics<parallel>, #tpu.dimension_semantics<arbitrary>], iteration_bounds = array<i64: 1, 1, 1>, scalar_prefetch = 0 : i64, scratch_operands = 1 : i64, tpu.core_type = #tpu.core_type<tc>, window_params = [{transform_indices = @transform_0, window_bounds = array<i64: 16, 32>}, {transform_indices = @transform_1, window_bounds = array<i64: 32, 32>}, {transform_indices = @transform_2, window_bounds = array<i64: 1, 32>}, {transform_indices = @transform_3, window_bounds = array<i64: 16, 32>}]} {
    %c0_i32 = arith.constant 0 : i32
    %0 = arith.cmpi eq, %arg2, %c0_i32 : i32
    %1 = arith.extui %0 : i1 to i32
    %c0_i32_0 = arith.constant 0 : i32
    %2 = arith.cmpi ne, %1, %c0_i32_0 : i32
    scf.if %2 {
      %cst_10 = arith.constant 0.000000e+00 : f32
      %12 = vector.broadcast %cst_10 : f32 to vector<16x32xf32>
      %c0_11 = arith.constant 0 : index
      %c0_12 = arith.constant 0 : index
      %13 = vector.load %arg7[%c0_11, %c0_12] : memref<16x32xf32, #tpu.memory_space<vmem>>, vector<16x32xf32>
      tpu.vector_store %arg7[%c0_11, %c0_12], %12 {strides = array<i32>} : memref<16x32xf32, #tpu.memory_space<vmem>>, vector<16x32xf32>,
    } else {
    }
    %c0 = arith.constant 0 : index
    %c0_1 = arith.constant 0 : index
    %3 = vector.load %arg7[%c0, %c0_1] : memref<16x32xf32, #tpu.memory_space<vmem>>, vector<16x32xf32>
    %c0_2 = arith.constant 0 : index
    %c0_3 = arith.constant 0 : index
    %4 = vector.load %arg3[%c0_2, %c0_3] : memref<16x32xf32, #tpu.memory_space<vmem>>, vector<16x32xf32>
    %c0_4 = arith.constant 0 : index
    %c0_5 = arith.constant 0 : index
    %5 = vector.load %arg4[%c0_4, %c0_5] : memref<32x32xf32, #tpu.memory_space<vmem>>, vector<32x32xf32>
    %cst = arith.constant dense<0.000000e+00> : vector<16x32xf32>
    %6 = tpu.matmul %4, %5, %cst {dimension_numbers = #tpu.dot_dimension_numbers<[1], [0], [0], [1], [0, 0, 1, 1], [], []>} : vector<16x32xf32>, vector<32x32xf32>, vector<16x32xf32> -> vector<16x32xf32>
    %7 = arith.addf %3, %6 : vector<16x32xf32>
    %c0_6 = arith.constant 0 : index
    %c0_7 = arith.constant 0 : index
    %8 = vector.load %arg7[%c0_6, %c0_7] : memref<16x32xf32, #tpu.memory_space<vmem>>, vector<16x32xf32>
    tpu.vector_store %arg7[%c0_6, %c0_7], %7 {strides = array<i32>} : memref<16x32xf32, #tpu.memory_space<vmem>>, vector<16x32xf32>,
    %c0_i32_8 = arith.constant 0 : i32
    %9 = arith.cmpi eq, %arg2, %c0_i32_8 : i32
    %10 = arith.extui %9 : i1 to i32
    %c0_i32_9 = arith.constant 0 : i32
    %11 = arith.cmpi ne, %10, %c0_i32_9 : i32
    scf.if %11 {
      %c0_10 = arith.constant 0 : index
      %c0_11 = arith.constant 0 : index
      %12 = vector.load %arg7[%c0_10, %c0_11] : memref<16x32xf32, #tpu.memory_space<vmem>>, vector<16x32xf32>
      %c0_12 = arith.constant 0 : index
      %c0_13 = arith.constant 0 : index
      %13 = vector.load %arg5[%c0_12, %c0_13] : memref<1x32xf32, #tpu.memory_space<vmem>>, vector<1x32xf32>
      %14 = vector.broadcast %13 : vector<1x32xf32> to vector<16x32xf32>
      %15 = arith.addf %12, %14 : vector<16x32xf32>
      %c0_14 = arith.constant 0 : index
      %c0_15 = arith.constant 0 : index
      %16 = vector.load %arg6[%c0_14, %c0_15] : memref<16x32xf32, #tpu.memory_space<vmem>>, vector<16x32xf32>
      tpu.vector_store %arg6[%c0_14, %c0_15], %15 {strides = array<i32>} : memref<16x32xf32, #tpu.memory_space<vmem>>, vector<16x32xf32>,
    } else {
    }
    return
  }
  func.func @transform_0(%arg0: i32, %arg1: i32, %arg2: i32) -> (i32, i32) {
    %c0_i32 = arith.constant 0 : i32
    return %arg0, %arg2 : i32, i32
  }
  func.func @transform_1(%arg0: i32, %arg1: i32, %arg2: i32) -> (i32, i32) {
    %c0_i32 = arith.constant 0 : i32
    return %arg2, %arg1 : i32, i32
  }
  func.func @transform_2(%arg0: i32, %arg1: i32, %arg2: i32) -> (i32, i32) {
    %c0_i32 = arith.constant 0 : i32
    %c0_i32_0 = arith.constant 0 : i32
    return %c0_i32, %arg1 : i32, i32
  }
  func.func @transform_3(%arg0: i32, %arg1: i32, %arg2: i32) -> (i32, i32) {
    %c0_i32 = arith.constant 0 : i32
    return %arg0, %arg1 : i32, i32
  }
}

</mosaic_0001>

<llo_original>
// kernel: self_attention_forward.3
$region0: #{self_attention_forward.3}
  #allocation0 [shape = 'u32[]', space=smem, size = 0x4, offset = 0x4, fixed_abs, tag = 'smem constant byte address 0x4 - core index']
  #allocation1 [shape = 'u32[144,128]{1,0:T(1,128)}', space=vmem, size = 0x12000, scoped, tag = 'internal scratch']
  #allocation2 [shape = 'f32[16,96]{1,0:T(8,128)}', space=vmem, size = 0x2000, scoped, tag = 'scratch operand']
  %s0 = inlined_call_operand.vmem [shape: f32[16,32], index: 0, kind: input, shape index: {}]
  %s1 = inlined_call_operand.vmem [shape: f32[32,96], index: 1, kind: input, shape index: {}]
  %s2 = inlined_call_operand.vmem [shape: f32[16,96], index: 2, kind: output, shape index: {}]
  %s3 = sld [smem:[#allocation0]]
  $region26: #{self_attention_forward.3} parent=0
    _
  %s5 = ssub.s32 1, %s3
  %s6 = scalar_select 0, %s5, %s3
  // Predicated region
  $region2: #{self_attention_forward.3} parent=0 // pred_check
    _
  $region3: #{self_attention_forward.3} parent=0 // pred_check_branch
    %8 = sbr.rel (0) target = $region5
  $region4: #{self_attention_forward.3} parent=0 // pred_region
    _
  $region5: #{self_attention_forward.3} parent=0 // pred_fallthru
    _
  // Predicated region
  $region6: #{self_attention_forward.3} parent=0 // pred_check
    _
  $region7: #{self_attention_forward.3} parent=0 // pred_check_branch
    %10 = sbr.rel (0) target = $region9
  $region8: #{self_attention_forward.3} parent=0 // pred_region
    _
  $region9: #{self_attention_forward.3} parent=0 // pred_fallthru
    _
  %p11 = scmp.eq.s32.totalorder 0, 0
  // Predicated region
  $region10: #{self_attention_forward.3} parent=0 // pred_check
    %p12 = pneg %p11
  $region11: #{self_attention_forward.3} parent=0 // pred_check_branch
    %14 = sbr.rel (%p12) target = $region13
  $region12: #{self_attention_forward.3} parent=0 // pred_region
    %vm15 = vcmask 785408
    %16 = vst.msk [vmem:[#allocation2] sm:$0xff] %vm15, 0.0
    %17 = vst.msk [vmem:[#allocation2 + $0x8] sm:$0xff] %vm15, 0.0
  $region13: #{self_attention_forward.3} parent=0 // pred_fallthru
    _
  %v18 = vld [vmem:[#allocation2] sm:$0xff]
  %v19 = vld [vmem:[#allocation2 + $0x8] sm:$0xff]
  %v20 = vld [vmem:[%s0] sm:$0xff]
  %v21 = vld [vmem:[%s0 + $0x8] sm:$0xff]
  %v22 = vld [vmem:[%s1] sm:$0xff]
  %v23 = vld [vmem:[%s1 + $0x8] sm:$0xff]
  %v24 = vld [vmem:[%s1 + $0x10] sm:$0xff]
  %v25 = vld [vmem:[%s1 + $0x18] sm:$0xff]
  %vm26 = vcmask 261120
  %v28 = vsel %vm26, %v20, 0
  %v31 = vsel %vm26, %v21, 0
  %33 = vmatprep.subr.mxu0 0.0
  %34 = vmatpush1.msra.mxu0 %v22
  %35 = vmatprep.subr.mxu0 0.0
  %36 = vmatpush1.msra.mxu0 %v23
  %37 = vmatprep.subr.mxu0 0.0
  %38 = vmatpush1.msra.mxu0 %v24
  %39 = vmatprep.subr.mxu0 0.0
  %40 = vmatpush1.msra.mxu0 %v25
  %41 = vmatprep.subr.mxu0 0.0
  %42 = vmatpush1.msra.mxu0 0.0
  %43 = vmatprep.subr.mxu0 0.0
  %44 = vmatpush1.msra.mxu0 0.0
  %45 = vmatprep.subr.mxu0 0.0
  %46 = vmatpush1.msra.mxu0 0.0
  %47 = vmatprep.subr.mxu0 0.0
  %48 = vmatpush1.msra.mxu0 0.0
  %49 = vmatprep.subr.mxu0 0.0
  %50 = vmatpush1.msra.mxu0 0.0
  %51 = vmatprep.subr.mxu0 0.0
  %52 = vmatpush1.msra.mxu0 0.0
  %53 = vmatprep.subr.mxu0 0.0
  %54 = vmatpush1.msra.mxu0 0.0
  %55 = vmatprep.subr.mxu0 0.0
  %56 = vmatpush1.msra.mxu0 0.0
  %57 = vmatprep.subr.mxu0 0.0
  %58 = vmatpush1.msra.mxu0 0.0
  %59 = vmatprep.subr.mxu0 0.0
  %60 = vmatpush1.msra.mxu0 0.0
  %61 = vmatprep.subr.mxu0 0.0
  %62 = vmatpush1.msra.mxu0 0.0
  %63 = vmatprep.subr.mxu0 0.0
  %64 = vmatpush1.msra.mxu0 0.0
  %65 = vmatprep.subr.mxu0 0.0
  %66 = vmatpush1.msra.mxu0 0.0
  %67 = vmatprep.subr.mxu0 0.0
  %68 = vmatpush1.msra.mxu0 0.0
  %69 = vmatprep.subr.mxu0 0.0
  %70 = vmatpush1.msra.mxu0 0.0
  %71 = vmatprep.subr.mxu0 0.0
  %72 = vmatpush1.msra.mxu0 0.0
  %73 = vmatprep.subr.mxu0 0.0
  %74 = vmatpush1.msra.mxu0 0.0
  %75 = vmatprep.subr.mxu0 0.0
  %76 = vmatpush1.msra.mxu0 0.0
  %77 = vmatprep.subr.mxu0 0.0
  %78 = vmatpush1.msra.mxu0 0.0
  %79 = vmatprep.subr.mxu0 0.0
  %80 = vmatpush1.msra.mxu0 0.0
  %81 = vmatprep.subr.mxu0 0.0
  %82 = vmatpush1.msra.mxu0 0.0
  %83 = vmatprep.subr.mxu0 0.0
  %84 = vmatpush1.msra.mxu0 0.0
  %85 = vmatprep.subr.mxu0 0.0
  %86 = vmatpush1.msra.mxu0 0.0
  %87 = vmatprep.subr.mxu0 0.0
  %88 = vmatpush1.msra.mxu0 0.0
  %89 = vmatprep.subr.mxu0 0.0
  %90 = vmatpush1.msra.mxu0 0.0
  %91 = vmatprep.subr.mxu0 0.0
  %92 = vmatpush1.msra.mxu0 0.0
  %93 = vmatprep.subr.mxu0 0.0
  %94 = vmatpush1.msra.mxu0 0.0
  %95 = vmatprep.subr.mxu0 0.0
  %96 = vmatpush1.msra.mxu0 0.0
  %97 = vmatprep.mubr.f32.mxu0 0.0
  %98 = vmatmul.mubr.f32.gmra.mrb[0].mxu0 %v28
  %v99 = vpop.f32.mrb[0].mxu0
  %v100 = vadd.f32 0.0, %v99
  %v101 = vpop.f32.mrb[0].mxu0
  %102 = vmatprep.mubr.f32.mxu0 0.0
  %103 = vmatmul.mubr.f32.gmra.mrb[0].mxu0 %v31
  %v104 = vpop.f32.mrb[0].mxu0
  %v105 = vadd.f32 0.0, %v104
  %v106 = vpop.f32.mrb[0].mxu0
  %107 = vdwg.mxu0
  %v108 = vadd.f32 %v18, %v100
  %v109 = vadd.f32 %v19, %v105
  %vm110 = vcmask 785408
  %111 = vst.msk [vmem:[#allocation2] sm:$0xff] %vm110, %v108
  %112 = vst.msk [vmem:[#allocation2 + $0x8] sm:$0xff] %vm110, %v109
  // Predicated region
  $region14: #{self_attention_forward.3} parent=0 // pred_check
    %p113 = pneg %p11
  $region15: #{self_attention_forward.3} parent=0 // pred_check_branch
    %115 = sbr.rel (%p113) target = $region17
  $region16: #{self_attention_forward.3} parent=0 // pred_region
    %v116 = vld [vmem:[#allocation2] sm:$0xff]
    %v117 = vld [vmem:[#allocation2 + $0x8] sm:$0xff]
    %118 = vst.msk [vmem:[%s2] sm:$0xff] %vm110, %v116
    %119 = vst.msk [vmem:[%s2 + $0x8] sm:$0xff] %vm110, %v117
  $region17: #{self_attention_forward.3} parent=0 // pred_fallthru
    _
  // Predicated region
  $region18: #{self_attention_forward.3} parent=0 // pred_check
    _
  $region19: #{self_attention_forward.3} parent=0 // pred_check_branch
    %121 = sbr.rel (0) target = $region21
  $region20: #{self_attention_forward.3} parent=0 // pred_region
    _
  $region21: #{self_attention_forward.3} parent=0 // pred_fallthru
    _
  // Predicated region
  $region22: #{self_attention_forward.3} parent=0 // pred_check
    _
  $region23: #{self_attention_forward.3} parent=0 // pred_check_branch
    %123 = sbr.rel (0) target = $region25
  $region24: #{self_attention_forward.3} parent=0 // pred_region
    _
  $region25: #{self_attention_forward.3} parent=0 // pred_fallthru
    _

// kernel: self_attention_forward.5
$region0: #{self_attention_forward.5}
  #allocation0 [shape = 'u32[]', space=smem, size = 0x4, offset = 0x4, fixed_abs, tag = 'smem constant byte address 0x4 - core index']
  #allocation1 [shape = 'u32[144,128]{1,0:T(1,128)}', space=vmem, size = 0x12000, scoped, tag = 'internal scratch']
  #allocation2 [shape = 'f32[16,32]{1,0:T(8,128)}', space=vmem, size = 0x2000, scoped, tag = 'scratch operand']
  %s0 = inlined_call_operand.vmem [shape: f32[16,32], index: 0, kind: input, shape index: {}]
  %s1 = inlined_call_operand.vmem [shape: f32[32,32], index: 1, kind: input, shape index: {}]
  %s2 = inlined_call_operand.vmem [shape: f32[1,32], index: 2, kind: input, shape index: {}]
  %s3 = inlined_call_operand.hbm [shape: f32[16,32], index: 3, kind: output, shape index: {}]
  %s4 = sld [smem:[#allocation0]]
  $region30: #{self_attention_forward.5} parent=0
    _
  %s6 = ssub.s32 1, %s4
  %s7 = scalar_select 0, %s6, %s4
  $region1: #{self_attention_forward.5} parent=0
    #allocation3 [shape = 'u8[8192]{0}', space=vmem, size = 0x2000, scoped, tag = 'output window, operand 0, single buffered']
    #allocation4 [shape = 's32[1]{0}', space=sflag, size = 0x4, scoped, tag = 'scoped memory for self_attention_forward.5']
    %8 = vsyncpa [#allocation4], 0
    // Predicated region
    $region2: #{self_attention_forward.5} parent=1 // pred_check
      _
    $region3: #{self_attention_forward.5} parent=1 // pred_check_branch
      %10 = sbr.rel (0) target = $region5
    $region4: #{self_attention_forward.5} parent=1 // pred_region
      _
    $region5: #{self_attention_forward.5} parent=1 // pred_fallthru
      _
    // Predicated region
    $region6: #{self_attention_forward.5} parent=1 // pred_check
      _
    $region7: #{self_attention_forward.5} parent=1 // pred_check_branch
      %12 = sbr.rel (0) target = $region9
    $region8: #{self_attention_forward.5} parent=1 // pred_region
      _
    $region9: #{self_attention_forward.5} parent=1 // pred_fallthru
      _
    // Predicated region
    $region10: #{self_attention_forward.5} parent=1 // pred_check
      _
    $region11: #{self_attention_forward.5} parent=1 // pred_check_branch
      %14 = sbr.rel (0) target = $region13
    $region12: #{self_attention_forward.5} parent=1 // pred_region
      _
    $region13: #{self_attention_forward.5} parent=1 // pred_fallthru
      _
    %p15 = scmp.eq.s32.totalorder 0, 0
    // Predicated region
    $region14: #{self_attention_forward.5} parent=1 // pred_check
      %p16 = pneg %p15
    $region15: #{self_attention_forward.5} parent=1 // pred_check_branch
      %18 = sbr.rel (%p16) target = $region17
    $region16: #{self_attention_forward.5} parent=1 // pred_region
      %vm19 = vcmask 261120
      %20 = vst.msk [vmem:[#allocation2] sm:$0xff] %vm19, 0.0
      %21 = vst.msk [vmem:[#allocation2 + $0x8] sm:$0xff] %vm19, 0.0
    $region17: #{self_attention_forward.5} parent=1 // pred_fallthru
      _
    %v22 = vld [vmem:[#allocation2] sm:$0xff]
    %v23 = vld [vmem:[#allocation2 + $0x8] sm:$0xff]
    %v24 = vld [vmem:[%s0] sm:$0xff]
    %v25 = vld [vmem:[%s0 + $0x8] sm:$0xff]
    %v26 = vld [vmem:[%s1] sm:$0xff]
    %v27 = vld [vmem:[%s1 + $0x8] sm:$0xff]
    %v28 = vld [vmem:[%s1 + $0x10] sm:$0xff]
    %v29 = vld [vmem:[%s1 + $0x18] sm:$0xff]
    %vm30 = vcmask 261120
    %v32 = vsel %vm30, %v24, 0
    %v35 = vsel %vm30, %v25, 0
    %37 = vmatprep.subr.mxu0 0.0
    %38 = vmatpush1.msra.mxu0 %v26
    %39 = vmatprep.subr.mxu0 0.0
    %40 = vmatpush1.msra.mxu0 %v27
    %41 = vmatprep.subr.mxu0 0.0
    %42 = vmatpush1.msra.mxu0 %v28
    %43 = vmatprep.subr.mxu0 0.0
    %44 = vmatpush1.msra.mxu0 %v29
    %45 = vmatprep.subr.mxu0 0.0
    %46 = vmatpush1.msra.mxu0 0.0
    %47 = vmatprep.subr.mxu0 0.0
    %48 = vmatpush1.msra.mxu0 0.0
    %49 = vmatprep.subr.mxu0 0.0
    %50 = vmatpush1.msra.mxu0 0.0
    %51 = vmatprep.subr.mxu0 0.0
    %52 = vmatpush1.msra.mxu0 0.0
    %53 = vmatprep.subr.mxu0 0.0
    %54 = vmatpush1.msra.mxu0 0.0
    %55 = vmatprep.subr.mxu0 0.0
    %56 = vmatpush1.msra.mxu0 0.0
    %57 = vmatprep.subr.mxu0 0.0
    %58 = vmatpush1.msra.mxu0 0.0
    %59 = vmatprep.subr.mxu0 0.0
    %60 = vmatpush1.msra.mxu0 0.0
    %61 = vmatprep.subr.mxu0 0.0
    %62 = vmatpush1.msra.mxu0 0.0
    %63 = vmatprep.subr.mxu0 0.0
    %64 = vmatpush1.msra.mxu0 0.0
    %65 = vmatprep.subr.mxu0 0.0
    %66 = vmatpush1.msra.mxu0 0.0
    %67 = vmatprep.subr.mxu0 0.0
    %68 = vmatpush1.msra.mxu0 0.0
    %69 = vmatprep.subr.mxu0 0.0
    %70 = vmatpush1.msra.mxu0 0.0
    %71 = vmatprep.subr.mxu0 0.0
    %72 = vmatpush1.msra.mxu0 0.0
    %73 = vmatprep.subr.mxu0 0.0
    %74 = vmatpush1.msra.mxu0 0.0
    %75 = vmatprep.subr.mxu0 0.0
    %76 = vmatpush1.msra.mxu0 0.0
    %77 = vmatprep.subr.mxu0 0.0
    %78 = vmatpush1.msra.mxu0 0.0
    %79 = vmatprep.subr.mxu0 0.0
    %80 = vmatpush1.msra.mxu0 0.0
    %81 = vmatprep.subr.mxu0 0.0
    %82 = vmatpush1.msra.mxu0 0.0
    %83 = vmatprep.subr.mxu0 0.0
    %84 = vmatpush1.msra.mxu0 0.0
    %85 = vmatprep.subr.mxu0 0.0
    %86 = vmatpush1.msra.mxu0 0.0
    %87 = vmatprep.subr.mxu0 0.0
    %88 = vmatpush1.msra.mxu0 0.0
    %89 = vmatprep.subr.mxu0 0.0
    %90 = vmatpush1.msra.mxu0 0.0
    %91 = vmatprep.subr.mxu0 0.0
    %92 = vmatpush1.msra.mxu0 0.0
    %93 = vmatprep.subr.mxu0 0.0
    %94 = vmatpush1.msra.mxu0 0.0
    %95 = vmatprep.subr.mxu0 0.0
    %96 = vmatpush1.msra.mxu0 0.0
    %97 = vmatprep.subr.mxu0 0.0
    %98 = vmatpush1.msra.mxu0 0.0
    %99 = vmatprep.subr.mxu0 0.0
    %100 = vmatpush1.msra.mxu0 0.0
    %101 = vmatprep.mubr.f32.mxu0 0.0
    %102 = vmatmul.mubr.f32.gmra.mrb[0].mxu0 %v32
    %v103 = vpop.f32.mrb[0].mxu0
    %v104 = vadd.f32 0.0, %v103
    %v105 = vpop.f32.mrb[0].mxu0
    %106 = vmatprep.mubr.f32.mxu0 0.0
    %107 = vmatmul.mubr.f32.gmra.mrb[0].mxu0 %v35
    %v108 = vpop.f32.mrb[0].mxu0
    %v109 = vadd.f32 0.0, %v108
    %v110 = vpop.f32.mrb[0].mxu0
    %111 = vdwg.mxu0
    %v112 = vadd.f32 %v22, %v104
    %v113 = vadd.f32 %v23, %v109
    %114 = vst.msk [vmem:[#allocation2] sm:$0xff] %vm30, %v112
    %115 = vst.msk [vmem:[#allocation2 + $0x8] sm:$0xff] %vm30, %v113
    // Predicated region
    $region18: #{self_attention_forward.5} parent=1 // pred_check
      %p116 = pneg %p15
    $region19: #{self_attention_forward.5} parent=1 // pred_check_branch
      %118 = sbr.rel (%p116) target = $region21
    $region20: #{self_attention_forward.5} parent=1 // pred_region
      %v119 = vld [vmem:[#allocation2] sm:$0xff]
      %v120 = vld [vmem:[#allocation2 + $0x8] sm:$0xff]
      %v121 = vld [vmem:[%s2] sm:$0x1]
      %v123 = vlaneseq
      %v124 = vshrl.u32 %v123, 7
      %v125 = vsub.s32 0, %v124
      %v126 = vrot.slane %v121, %v125
      %v128 = vadd.f32 %v119, %v126
      %v129 = vadd.f32 %v120, %v126
      %130 = vst.msk [vmem:[#allocation3] sm:$0xff] %vm30, %v128
      %131 = vst.msk [vmem:[#allocation3 + $0x8] sm:$0xff] %vm30, %v129
    $region21: #{self_attention_forward.5} parent=1 // pred_fallthru
      _
    // Predicated region
    $region22: #{self_attention_forward.5} parent=1 // pred_check
      _
    $region23: #{self_attention_forward.5} parent=1 // pred_check_branch
      %133 = sbr.rel (0) target = $region25
    $region24: #{self_attention_forward.5} parent=1 // pred_region
      %s135 = ssub.s32 256, 256
      %136 = vsyncadd [#allocation4], %s135
      %s137 = sshll.u32 [#allocation3], 4
      %s138 = int_to_ptr.vmem [resolvable:$true] %s137
      %143 = dma.vmem_to_hbm [thread:$0]  %s138, 256, %s3, [#allocation4], 128, 128, 8
    $region25: #{self_attention_forward.5} parent=1 // pred_fallthru
      _
    // Predicated region
    $region26: #{self_attention_forward.5} parent=1 // pred_check
      _
    $region27: #{self_attention_forward.5} parent=1 // pred_check_branch
      %145 = sbr.rel (0) target = $region29
    $region28: #{self_attention_forward.5} parent=1 // pred_region
      %146 = dma.done [#allocation4], 256
    $region29: #{self_attention_forward.5} parent=1 // pred_fallthru
      _
    %147 = vsyncpa [#allocation4], 1

// kernel: self_attention_forward.4
$region0: #{self_attention_forward.4}
  #allocation0 [shape = 'u32[]', space=smem, size = 0x4, offset = 0x4, fixed_abs, tag = 'smem constant byte address 0x4 - core index']
  #allocation1 [shape = 'u32[144,128]{1,0:T(1,128)}', space=vmem, size = 0x12000, scoped, tag = 'internal scratch']
  #allocation2 [shape = 'f32[4,8,1]{2,1,0:T(8,128)}', space=vmem, size = 0x4000, scoped, tag = 'scratch operand']
  #allocation3 [shape = 'f32[4,8,1]{2,1,0:T(8,128)}', space=vmem, size = 0x4000, scoped, tag = 'scratch operand']
  #allocation4 [shape = 'f32[4,8,8]{2,1,0:T(8,128)}', space=vmem, size = 0x4000, scoped, tag = 'scratch operand']
  %s0 = inlined_call_operand.vmem [shape: f32[8,8,8], index: 0, kind: input, shape index: {}]
  %s1 = inlined_call_operand.vmem [shape: f32[8,8,8], index: 1, kind: input, shape index: {}]
  %s2 = inlined_call_operand.vmem [shape: f32[8,8,8], index: 2, kind: input, shape index: {}]
  %s3 = inlined_call_operand.vmem [shape: f32[8,8,8], index: 3, kind: output, shape index: {}]
  %s4 = sld [smem:[#allocation0]]
  $region53: #{self_attention_forward.4} parent=0
    _
  %s6 = ssub.s32 1, %s4
  %s7 = scalar_select 0, %s6, %s4
  loop: start=0, step=1, limit=4
  $region2: #{self_attention_forward.4} parent=0 // loop_pre_header
    _
  $region3: #{self_attention_forward.4} parent=0 // loop_header
    %s9 = sphi 0, %s13
    %p10 = scmp.ge.s32.totalorder %s9, 4
    %s16 = sphi 0, %s35
    %s17 = sphi 0, %s31
    %s18 = sphi 0, %s27
    %s19 = sphi 0, %s16
    %s20 = sphi 0, %s17
    %s21 = sphi 0, %s18
    %s22 = sphi 0, %s19
    %s23 = sphi 0, %s20
    %s24 = sphi 0, %s21
    %s40 = sphi 0, %s42
    %s43 = sphi 0, %s40
    %s44 = sphi 0, %s43
    %s60 = sphi 0, %s44
    %s68 = sphi 0, %s70
    %s71 = sphi 0, %s68
    %s72 = sphi 0, %s71
    %s88 = sphi 0, %s72
    %s96 = sphi 0, %s98
    %s99 = sphi 0, %s96
    %s100 = sphi 0, %s99
    %s116 = sphi 0, %s100
    %s124 = sphi 0, %s126
    %s127 = sphi 0, %s124
    %s128 = sphi 0, %s127
    %s144 = sphi 0, %s128
  $region4: #{self_attention_forward.4} parent=0 // loop_header_branch
    %12 = sbr.rel (%p10) target = $region8
  $region5: #{self_attention_forward.4} parent=0 // loop_body
    %s14 = ssub.s32 %s9, 1
    %s15 = ssub.s32 %s9, 2
    %s25 = sadd.s32 1, %s18
    %p26 = scmp.ge.s32.totalorder %s25, 1
    %s27 = scalar_select %p26, 0, %s25
    %s28 = sadd.s32 1, %s17
    %s29 = scalar_select %p26, %s28, %s17
    %p30 = scmp.ge.s32.totalorder %s29, 1
    %s31 = scalar_select %p30, 0, %s29
    %s32 = sadd.s32 1, %s16
    %s33 = scalar_select %p30, %s32, %s16
    %p34 = scmp.ge.s32.totalorder %s33, 2
    %s35 = scalar_select %p34, 0, %s33
    %s36 = ssub.s32 %s16, %s35
    %s37 = ssub.s32 %s17, %s31
    %s38 = sor.u32 %s36, %s37
    %p39 = scmp.eq.s32.totalorder %s38, 0
    %s41 = sadd.s32 %s40, 1
    %s42 = scalar_select %p39, %s40, %s41
    %p45 = pneg %p39
    %p46 = scmp.eq.s32.totalorder %s9, 1
    %p47 = por %p45, %p46
    %p48 = scmp.ne.s32.totalorder %s40, %s43
    %p49 = scmp.eq.s32.totalorder %s9, 0
    %p50 = por %p48, %p49
    %p51 = scmp.ne.s32.totalorder %s40, %s43
    %p52 = scmp.eq.s32.totalorder %s14, 1
    %p53 = por %p51, %p52
    %p54 = scmp.ne.s32.totalorder %s43, %s44
    %p55 = scmp.eq.s32.totalorder %s14, 0
    %p56 = por %p54, %p55
    %p57 = scmp.ne.s32.totalorder %s43, %s44
    %p58 = scmp.eq.s32.totalorder %s15, 1
    %p59 = por %p57, %p58
    %p61 = scmp.ne.s32.totalorder %s44, %s60
    %p62 = scmp.eq.s32.totalorder %s15, 0
    %p63 = por %p61, %p62
    %s64 = ssub.s32 %s16, %s35
    %s65 = ssub.s32 %s18, %s27
    %s66 = sor.u32 %s64, %s65
    %p67 = scmp.eq.s32.totalorder %s66, 0
    %s69 = sadd.s32 %s68, 1
    %s70 = scalar_select %p67, %s68, %s69
    %p73 = pneg %p67
    %p74 = scmp.eq.s32.totalorder %s9, 1
    %p75 = por %p73, %p74
    %p76 = scmp.ne.s32.totalorder %s68, %s71
    %p77 = scmp.eq.s32.totalorder %s9, 0
    %p78 = por %p76, %p77
    %p79 = scmp.ne.s32.totalorder %s68, %s71
    %p80 = scmp.eq.s32.totalorder %s14, 1
    %p81 = por %p79, %p80
    %p82 = scmp.ne.s32.totalorder %s71, %s72
    %p83 = scmp.eq.s32.totalorder %s14, 0
    %p84 = por %p82, %p83
    %p85 = scmp.ne.s32.totalorder %s71, %s72
    %p86 = scmp.eq.s32.totalorder %s15, 1
    %p87 = por %p85, %p86
    %p89 = scmp.ne.s32.totalorder %s72, %s88
    %p90 = scmp.eq.s32.totalorder %s15, 0
    %p91 = por %p89, %p90
    %s92 = ssub.s32 %s16, %s35
    %s93 = ssub.s32 %s18, %s27
    %s94 = sor.u32 %s92, %s93
    %p95 = scmp.eq.s32.totalorder %s94, 0
    %s97 = sadd.s32 %s96, 1
    %s98 = scalar_select %p95, %s96, %s97
    %p101 = pneg %p95
    %p102 = scmp.eq.s32.totalorder %s9, 1
    %p103 = por %p101, %p102
    %p104 = scmp.ne.s32.totalorder %s96, %s99
    %p105 = scmp.eq.s32.totalorder %s9, 0
    %p106 = por %p104, %p105
    %p107 = scmp.ne.s32.totalorder %s96, %s99
    %p108 = scmp.eq.s32.totalorder %s14, 1
    %p109 = por %p107, %p108
    %p110 = scmp.ne.s32.totalorder %s99, %s100
    %p111 = scmp.eq.s32.totalorder %s14, 0
    %p112 = por %p110, %p111
    %p113 = scmp.ne.s32.totalorder %s99, %s100
    %p114 = scmp.eq.s32.totalorder %s15, 1
    %p115 = por %p113, %p114
    %p117 = scmp.ne.s32.totalorder %s100, %s116
    %p118 = scmp.eq.s32.totalorder %s15, 0
    %p119 = por %p117, %p118
    %s120 = ssub.s32 %s16, %s35
    %s121 = ssub.s32 %s17, %s31
    %s122 = sor.u32 %s120, %s121
    %p123 = scmp.eq.s32.totalorder %s122, 0
    %s125 = sadd.s32 %s124, 1
    %s126 = scalar_select %p123, %s124, %s125
    %p129 = pneg %p123
    %p130 = scmp.eq.s32.totalorder %s9, 1
    %p131 = por %p129, %p130
    %p132 = scmp.ne.s32.totalorder %s124, %s127
    %p133 = scmp.eq.s32.totalorder %s9, 0
    %p134 = por %p132, %p133
    %p135 = scmp.ne.s32.totalorder %s124, %s127
    %p136 = scmp.eq.s32.totalorder %s14, 1
    %p137 = por %p135, %p136
    %p138 = scmp.ne.s32.totalorder %s127, %s128
    %p139 = scmp.eq.s32.totalorder %s14, 0
    %p140 = por %p138, %p139
    %p141 = scmp.ne.s32.totalorder %s127, %s128
    %p142 = scmp.eq.s32.totalorder %s15, 1
    %p143 = por %p141, %p142
    %p145 = scmp.ne.s32.totalorder %s128, %s144
    %p146 = scmp.eq.s32.totalorder %s15, 0
    %p147 = por %p145, %p146
    %p148 = scmp.le.s32.totalorder 1, %s9
    %p149 = scmp.lt.s32.totalorder %s9, 3
    %p150 = pnand %p148, %p149
    %p151 = pneg %p150
    // Predicated region
    $region9: #{self_attention_forward.4} parent=5 // pred_check
      _
    $region10: #{self_attention_forward.4} parent=5 // pred_check_branch
      %153 = sbr.rel (%p150) target = $region12
    $region11: #{self_attention_forward.4} parent=5 // pred_region
      %s154 = ssub.s32 %s9, 1
    $region12: #{self_attention_forward.4} parent=5 // pred_fallthru
      _
    %p155 = scmp.lt.s32.totalorder %s9, 2
    // Predicated region
    $region13: #{self_attention_forward.4} parent=5 // pred_check
      %p156 = pneg %p155
    $region14: #{self_attention_forward.4} parent=5 // pred_check_branch
      %158 = sbr.rel (%p156) target = $region16
    $region15: #{self_attention_forward.4} parent=5 // pred_region
      // Predicated region
      $region17: #{self_attention_forward.4} parent=15 // pred_check
        %p159 = pneg %p50
      $region18: #{self_attention_forward.4} parent=15 // pred_check_branch
        %161 = sbr.rel (%p159) target = $region20
      $region19: #{self_attention_forward.4} parent=15 // pred_region
        %s162 = smul.u32 4, %s16
        %p163 = scmp.lt.s32.totalorder %s162, 7
        %s164 = scalar_select %p163, %s162, 7
        %p165 = scmp.lt.s32.totalorder %s17, 0
        %s166 = scalar_select %p165, %s17, 0
        %s167 = sadd.s32 %s166, %s164
        %s168 = smul.addr %s167, 8
        %s169 = scalar_lea.vmem %s0, %s168
        %s170 = smul.u32 4, %s16
      $region20: #{self_attention_forward.4} parent=15 // pred_fallthru
        _
      // Predicated region
      $region21: #{self_attention_forward.4} parent=15 // pred_check
        %p171 = pneg %p78
      $region22: #{self_attention_forward.4} parent=15 // pred_check_branch
        %173 = sbr.rel (%p171) target = $region24
      $region23: #{self_attention_forward.4} parent=15 // pred_region
        %s174 = smul.u32 4, %s16
        %p175 = scmp.lt.s32.totalorder %s174, 7
        %s176 = scalar_select %p175, %s174, 7
        %p177 = scmp.lt.s32.totalorder %s18, 0
        %s178 = scalar_select %p177, %s18, 0
        %s179 = sadd.s32 %s178, %s176
        %s180 = smul.addr %s179, 8
        %s181 = scalar_lea.vmem %s1, %s180
        %s182 = smul.u32 4, %s16
      $region24: #{self_attention_forward.4} parent=15 // pred_fallthru
        _
      // Predicated region
      $region25: #{self_attention_forward.4} parent=15 // pred_check
        %p183 = pneg %p106
      $region26: #{self_attention_forward.4} parent=15 // pred_check_branch
        %185 = sbr.rel (%p183) target = $region28
      $region27: #{self_attention_forward.4} parent=15 // pred_region
        %s186 = smul.u32 4, %s16
        %p187 = scmp.lt.s32.totalorder %s186, 7
        %s188 = scalar_select %p187, %s186, 7
        %p189 = scmp.lt.s32.totalorder %s18, 0
        %s190 = scalar_select %p189, %s18, 0
        %s191 = sadd.s32 %s190, %s188
        %s192 = smul.addr %s191, 8
        %s193 = scalar_lea.vmem %s2, %s192
        %s194 = smul.u32 4, %s16
      $region28: #{self_attention_forward.4} parent=15 // pred_fallthru
        _
    $region16: #{self_attention_forward.4} parent=5 // pred_fallthru
      _
    %p195 = scmp.le.s32.totalorder 1, %s9
    %p196 = scmp.lt.s32.totalorder %s9, 3
    %p197 = pnand %p195, %p196
    %p198 = pneg %p197
    // Predicated region
    $region29: #{self_attention_forward.4} parent=5 // pred_check
      _
    $region30: #{self_attention_forward.4} parent=5 // pred_check_branch
      %200 = sbr.rel (%p197) target = $region32
    $region31: #{self_attention_forward.4} parent=5 // pred_region
      %s201 = ssub.s32 %s9, 1
      %s202 = smul.u32 4, %s19
      %p203 = scmp.lt.s32.totalorder %s202, 7
      %s204 = scalar_select %p203, %s202, 7
      %p205 = scmp.lt.s32.totalorder %s20, 0
      %s206 = scalar_select %p205, %s20, 0
      %s207 = sadd.s32 %s206, %s204
      %s208 = smul.addr %s207, 8
      %s209 = scalar_lea.vmem %s0, %s208
      %p210 = pneg %p56
      %p211 = pneg %p53
      %s212 = smul.u32 4, %s19
      %p213 = scmp.lt.s32.totalorder %s212, 7
      %s214 = scalar_select %p213, %s212, 7
      %p215 = scmp.lt.s32.totalorder %s21, 0
      %s216 = scalar_select %p215, %s21, 0
      %s217 = sadd.s32 %s216, %s214
      %s218 = smul.addr %s217, 8
      %s219 = scalar_lea.vmem %s1, %s218
      %p220 = pneg %p84
      %p221 = pneg %p81
      %s222 = smul.u32 4, %s19
      %p223 = scmp.lt.s32.totalorder %s222, 7
      %s224 = scalar_select %p223, %s222, 7
      %p225 = scmp.lt.s32.totalorder %s21, 0
      %s226 = scalar_select %p225, %s21, 0
      %s227 = sadd.s32 %s226, %s224
      %s228 = smul.addr %s227, 8
      %s229 = scalar_lea.vmem %s2, %s228
      %p230 = pneg %p112
      %p231 = pneg %p109
      %p232 = pneg %p140
      %p233 = pneg %p137
      %s234 = smul.u32 4, %s19
      %p235 = scmp.lt.s32.totalorder %s234, 7
      %s236 = scalar_select %p235, %s234, 7
      %p237 = scmp.lt.s32.totalorder %s20, 0
      %s238 = scalar_select %p237, %s20, 0
      %s239 = sadd.s32 %s238, %s236
      %s240 = smul.addr %s239, 8
      %s241 = scalar_lea.vmem %s3, %s240
      %s242 = smul.u32 4, %s19
      %p243 = scmp.lt.s32.totalorder %s242, 7
      %s244 = scalar_select %p243, %s242, 7
      %p245 = scmp.lt.s32.totalorder %s20, 0
      %s246 = scalar_select %p245, %s20, 0
      %s247 = sadd.s32 %s246, %s244
      %s248 = smul.addr %s247, 8
      %s249 = scalar_lea.vmem %s0, %s248
      %s250 = smul.u32 4, %s19
      %s251 = smul.u32 4, %s19
      %p252 = scmp.lt.s32.totalorder %s251, 7
      %s253 = scalar_select %p252, %s251, 7
      %p254 = scmp.lt.s32.totalorder %s21, 0
      %s255 = scalar_select %p254, %s21, 0
      %s256 = sadd.s32 %s255, %s253
      %s257 = smul.addr %s256, 8
      %s258 = scalar_lea.vmem %s1, %s257
      %s259 = smul.u32 4, %s19
      %s260 = smul.u32 4, %s19
      %p261 = scmp.lt.s32.totalorder %s260, 7
      %s262 = scalar_select %p261, %s260, 7
      %p263 = scmp.lt.s32.totalorder %s21, 0
      %s264 = scalar_select %p263, %s21, 0
      %s265 = sadd.s32 %s264, %s262
      %s266 = smul.addr %s265, 8
      %s267 = scalar_lea.vmem %s2, %s266
      %s268 = smul.u32 4, %s19
      %s269 = smul.u32 4, %s19
      %p270 = scmp.lt.s32.totalorder %s269, 7
      %s271 = scalar_select %p270, %s269, 7
      %p272 = scmp.lt.s32.totalorder %s20, 0
      %s273 = scalar_select %p272, %s20, 0
      %s274 = sadd.s32 %s273, %s271
      %s275 = smul.addr %s274, 8
      %s276 = scalar_lea.vmem %s3, %s275
      %s277 = smul.u32 4, %s19
      %p278 = scmp.eq.s32.totalorder %s21, 0
      // Predicated region
      $region33: #{self_attention_forward.4} parent=31 // pred_check
        %p279 = pneg %p278
      $region34: #{self_attention_forward.4} parent=31 // pred_check_branch
        %281 = sbr.rel (%p279) target = $region36
      $region35: #{self_attention_forward.4} parent=31 // pred_region
        %vm282 = vcmask 7168
        %283 = vst.msk [vmem:[#allocation2] sm:$0xff] %vm282, -inf
        %284 = vst.msk [vmem:[#allocation2 + $0x8] sm:$0xff] %vm282, -inf
        %285 = vst.msk [vmem:[#allocation2 + $0x10] sm:$0xff] %vm282, -inf
        %286 = vst.msk [vmem:[#allocation2 + $0x18] sm:$0xff] %vm282, -inf
        %287 = vst.msk [vmem:[#allocation3] sm:$0xff] %vm282, 0.0
        %288 = vst.msk [vmem:[#allocation3 + $0x8] sm:$0xff] %vm282, 0.0
        %289 = vst.msk [vmem:[#allocation3 + $0x10] sm:$0xff] %vm282, 0.0
        %290 = vst.msk [vmem:[#allocation3 + $0x18] sm:$0xff] %vm282, 0.0
        %vm291 = vcmask 64512
        %292 = vst.msk [vmem:[#allocation4] sm:$0xff] %vm291, 0.0
        %293 = vst.msk [vmem:[#allocation4 + $0x8] sm:$0xff] %vm291, 0.0
        %294 = vst.msk [vmem:[#allocation4 + $0x10] sm:$0xff] %vm291, 0.0
        %295 = vst.msk [vmem:[#allocation4 + $0x18] sm:$0xff] %vm291, 0.0
      $region36: #{self_attention_forward.4} parent=31 // pred_fallthru
        _
      %v296 = vld [vmem:[%s249] sm:$0xff]
      %v297 = vld [vmem:[%s249 + $0x8] sm:$0xff]
      %v298 = vld [vmem:[%s249 + $0x10] sm:$0xff]
      %v299 = vld [vmem:[%s249 + $0x18] sm:$0xff]
      %v300 = vmul.f32 %v296, 0.17677669
      %v301 = vmul.f32 %v297, 0.17677669
      %v302 = vmul.f32 %v298, 0.17677669
      %v303 = vmul.f32 %v299, 0.17677669
      %v304 = vld [vmem:[%s258] sm:$0xff]
      %v305 = vld [vmem:[%s258 + $0x8] sm:$0xff]
      %v306 = vld [vmem:[%s258 + $0x10] sm:$0xff]
      %v307 = vld [vmem:[%s258 + $0x18] sm:$0xff]
      %vm308 = vcmask 64512
      %v310 = vsel %vm308, %v300, 0
      %v313 = vsel %vm308, %v304, 0
      %315 = vmatprep.subr.mxu0 0.0
      %316 = vmatpush1.xpose.msra.mxu0 %v313
      %317 = vmatprep.subr.mxu0 0.0
      %318 = vmatpush1.xpose.msra.mxu0 0.0
      %319 = vmatprep.subr.mxu0 0.0
      %320 = vmatpush1.xpose.msra.mxu0 0.0
      %321 = vmatprep.subr.mxu0 0.0
      %322 = vmatpush1.xpose.msra.mxu0 0.0
      %323 = vmatprep.subr.mxu0 0.0
      %324 = vmatpush1.xpose.msra.mxu0 0.0
      %325 = vmatprep.subr.mxu0 0.0
      %326 = vmatpush1.xpose.msra.mxu0 0.0
      %327 = vmatprep.subr.mxu0 0.0
      %328 = vmatpush1.xpose.msra.mxu0 0.0
      %329 = vmatprep.subr.mxu0 0.0
      %330 = vmatpush1.xpose.msra.mxu0 0.0
      %331 = vmatprep.subr.mxu0 0.0
      %332 = vmatpush1.xpose.msra.mxu0 0.0
      %333 = vmatprep.subr.mxu0 0.0
      %334 = vmatpush1.xpose.msra.mxu0 0.0
      %335 = vmatprep.subr.mxu0 0.0
      %336 = vmatpush1.xpose.msra.mxu0 0.0
      %337 = vmatprep.subr.mxu0 0.0
      %338 = vmatpush1.xpose.msra.mxu0 0.0
      %339 = vmatprep.subr.mxu0 0.0
      %340 = vmatpush1.xpose.msra.mxu0 0.0
      %341 = vmatprep.subr.mxu0 0.0
      %342 = vmatpush1.xpose.msra.mxu0 0.0
      %343 = vmatprep.subr.mxu0 0.0
      %344 = vmatpush1.xpose.msra.mxu0 0.0
      %345 = vmatprep.subr.mxu0 0.0
      %346 = vmatpush1.xpose.msra.mxu0 0.0
      %347 = vmatprep.subr.mxu0 0.0
      %348 = vmatpush1.xpose.msra.mxu0 0.0
      %349 = vmatprep.subr.mxu0 0.0
      %350 = vmatpush1.xpose.msra.mxu0 0.0
      %351 = vmatprep.subr.mxu0 0.0
      %352 = vmatpush1.xpose.msra.mxu0 0.0
      %353 = vmatprep.subr.mxu0 0.0
      %354 = vmatpush1.xpose.msra.mxu0 0.0
      %355 = vmatprep.subr.mxu0 0.0
      %356 = vmatpush1.xpose.msra.mxu0 0.0
      %357 = vmatprep.subr.mxu0 0.0
      %358 = vmatpush1.xpose.msra.mxu0 0.0
      %359 = vmatprep.subr.mxu0 0.0
      %360 = vmatpush1.xpose.msra.mxu0 0.0
      %361 = vmatprep.subr.mxu0 0.0
      %362 = vmatpush1.xpose.msra.mxu0 0.0
      %363 = vmatprep.subr.mxu0 0.0
      %364 = vmatpush1.xpose.msra.mxu0 0.0
      %365 = vmatprep.subr.mxu0 0.0
      %366 = vmatpush1.xpose.msra.mxu0 0.0
      %367 = vmatprep.subr.mxu0 0.0
      %368 = vmatpush1.xpose.msra.mxu0 0.0
      %369 = vmatprep.subr.mxu0 0.0
      %370 = vmatpush1.xpose.msra.mxu0 0.0
      %371 = vmatprep.subr.mxu0 0.0
      %372 = vmatpush1.xpose.msra.mxu0 0.0
      %373 = vmatprep.subr.mxu0 0.0
      %374 = vmatpush1.xpose.msra.mxu0 0.0
      %375 = vmatprep.subr.mxu0 0.0
      %376 = vmatpush1.xpose.msra.mxu0 0.0
      %377 = vmatprep.subr.mxu0 0.0
      %378 = vmatpush1.xpose.msra.mxu0 0.0
      %379 = vmatprep.mubr.f32.mxu0 0.0
      %380 = vmatmul.mubr.f32.gmra.mrb[0].mxu0 %v310
      %v381 = vpop.f32.mrb[0].mxu0
      %v382 = vadd.f32 0.0, %v381
      %v383 = vpop.f32.mrb[0].mxu0
      %384 = vdwg.mxu0
      %v386 = vsel %vm308, %v301, 0
      %v389 = vsel %vm308, %v305, 0
      %391 = vmatprep.subr.mxu0 0.0
      %392 = vmatpush1.xpose.msra.mxu0 %v389
      %393 = vmatprep.subr.mxu0 0.0
      %394 = vmatpush1.xpose.msra.mxu0 0.0
      %395 = vmatprep.subr.mxu0 0.0
      %396 = vmatpush1.xpose.msra.mxu0 0.0
      %397 = vmatprep.subr.mxu0 0.0
      %398 = vmatpush1.xpose.msra.mxu0 0.0
      %399 = vmatprep.subr.mxu0 0.0
      %400 = vmatpush1.xpose.msra.mxu0 0.0
      %401 = vmatprep.subr.mxu0 0.0
      %402 = vmatpush1.xpose.msra.mxu0 0.0
      %403 = vmatprep.subr.mxu0 0.0
      %404 = vmatpush1.xpose.msra.mxu0 0.0
      %405 = vmatprep.subr.mxu0 0.0
      %406 = vmatpush1.xpose.msra.mxu0 0.0
      %407 = vmatprep.subr.mxu0 0.0
      %408 = vmatpush1.xpose.msra.mxu0 0.0
      %409 = vmatprep.subr.mxu0 0.0
      %410 = vmatpush1.xpose.msra.mxu0 0.0
      %411 = vmatprep.subr.mxu0 0.0
      %412 = vmatpush1.xpose.msra.mxu0 0.0
      %413 = vmatprep.subr.mxu0 0.0
      %414 = vmatpush1.xpose.msra.mxu0 0.0
      %415 = vmatprep.subr.mxu0 0.0
      %416 = vmatpush1.xpose.msra.mxu0 0.0
      %417 = vmatprep.subr.mxu0 0.0
      %418 = vmatpush1.xpose.msra.mxu0 0.0
      %419 = vmatprep.subr.mxu0 0.0
      %420 = vmatpush1.xpose.msra.mxu0 0.0
      %421 = vmatprep.subr.mxu0 0.0
      %422 = vmatpush1.xpose.msra.mxu0 0.0
      %423 = vmatprep.subr.mxu0 0.0
      %424 = vmatpush1.xpose.msra.mxu0 0.0
      %425 = vmatprep.subr.mxu0 0.0
      %426 = vmatpush1.xpose.msra.mxu0 0.0
      %427 = vmatprep.subr.mxu0 0.0
      %428 = vmatpush1.xpose.msra.mxu0 0.0
      %429 = vmatprep.subr.mxu0 0.0
      %430 = vmatpush1.xpose.msra.mxu0 0.0
      %431 = vmatprep.subr.mxu0 0.0
      %432 = vmatpush1.xpose.msra.mxu0 0.0
      %433 = vmatprep.subr.mxu0 0.0
      %434 = vmatpush1.xpose.msra.mxu0 0.0
      %435 = vmatprep.subr.mxu0 0.0
      %436 = vmatpush1.xpose.msra.mxu0 0.0
      %437 = vmatprep.subr.mxu0 0.0
      %438 = vmatpush1.xpose.msra.mxu0 0.0
      %439 = vmatprep.subr.mxu0 0.0
      %440 = vmatpush1.xpose.msra.mxu0 0.0
      %441 = vmatprep.subr.mxu0 0.0
      %442 = vmatpush1.xpose.msra.mxu0 0.0
      %443 = vmatprep.subr.mxu0 0.0
      %444 = vmatpush1.xpose.msra.mxu0 0.0
      %445 = vmatprep.subr.mxu0 0.0
      %446 = vmatpush1.xpose.msra.mxu0 0.0
      %447 = vmatprep.subr.mxu0 0.0
      %448 = vmatpush1.xpose.msra.mxu0 0.0
      %449 = vmatprep.subr.mxu0 0.0
      %450 = vmatpush1.xpose.msra.mxu0 0.0
      %451 = vmatprep.subr.mxu0 0.0
      %452 = vmatpush1.xpose.msra.mxu0 0.0
      %453 = vmatprep.subr.mxu0 0.0
      %454 = vmatpush1.xpose.msra.mxu0 0.0
      %455 = vmatprep.mubr.f32.mxu0 0.0
      %456 = vmatmul.mubr.f32.gmra.mrb[0].mxu0 %v386
      %v457 = vpop.f32.mrb[0].mxu0
      %v458 = vadd.f32 0.0, %v457
      %v459 = vpop.f32.mrb[0].mxu0
      %460 = vdwg.mxu0
      %v462 = vsel %vm308, %v302, 0
      %v465 = vsel %vm308, %v306, 0
      %467 = vmatprep.subr.mxu0 0.0
      %468 = vmatpush1.xpose.msra.mxu0 %v465
      %469 = vmatprep.subr.mxu0 0.0
      %470 = vmatpush1.xpose.msra.mxu0 0.0
      %471 = vmatprep.subr.mxu0 0.0
      %472 = vmatpush1.xpose.msra.mxu0 0.0
      %473 = vmatprep.subr.mxu0 0.0
      %474 = vmatpush1.xpose.msra.mxu0 0.0
      %475 = vmatprep.subr.mxu0 0.0
      %476 = vmatpush1.xpose.msra.mxu0 0.0
      %477 = vmatprep.subr.mxu0 0.0
      %478 = vmatpush1.xpose.msra.mxu0 0.0
      %479 = vmatprep.subr.mxu0 0.0
      %480 = vmatpush1.xpose.msra.mxu0 0.0
      %481 = vmatprep.subr.mxu0 0.0
      %482 = vmatpush1.xpose.msra.mxu0 0.0
      %483 = vmatprep.subr.mxu0 0.0
      %484 = vmatpush1.xpose.msra.mxu0 0.0
      %485 = vmatprep.subr.mxu0 0.0
      %486 = vmatpush1.xpose.msra.mxu0 0.0
      %487 = vmatprep.subr.mxu0 0.0
      %488 = vmatpush1.xpose.msra.mxu0 0.0
      %489 = vmatprep.subr.mxu0 0.0
      %490 = vmatpush1.xpose.msra.mxu0 0.0
      %491 = vmatprep.subr.mxu0 0.0
      %492 = vmatpush1.xpose.msra.mxu0 0.0
      %493 = vmatprep.subr.mxu0 0.0
      %494 = vmatpush1.xpose.msra.mxu0 0.0
      %495 = vmatprep.subr.mxu0 0.0
      %496 = vmatpush1.xpose.msra.mxu0 0.0
      %497 = vmatprep.subr.mxu0 0.0
      %498 = vmatpush1.xpose.msra.mxu0 0.0
      %499 = vmatprep.subr.mxu0 0.0
      %500 = vmatpush1.xpose.msra.mxu0 0.0
      %501 = vmatprep.subr.mxu0 0.0
      %502 = vmatpush1.xpose.msra.mxu0 0.0
      %503 = vmatprep.subr.mxu0 0.0
      %504 = vmatpush1.xpose.msra.mxu0 0.0
      %505 = vmatprep.subr.mxu0 0.0
      %506 = vmatpush1.xpose.msra.mxu0 0.0
      %507 = vmatprep.subr.mxu0 0.0
      %508 = vmatpush1.xpose.msra.mxu0 0.0
      %509 = vmatprep.subr.mxu0 0.0
      %510 = vmatpush1.xpose.msra.mxu0 0.0
      %511 = vmatprep.subr.mxu0 0.0
      %512 = vmatpush1.xpose.msra.mxu0 0.0
      %513 = vmatprep.subr.mxu0 0.0
      %514 = vmatpush1.xpose.msra.mxu0 0.0
      %515 = vmatprep.subr.mxu0 0.0
      %516 = vmatpush1.xpose.msra.mxu0 0.0
      %517 = vmatprep.subr.mxu0 0.0
      %518 = vmatpush1.xpose.msra.mxu0 0.0
      %519 = vmatprep.subr.mxu0 0.0
      %520 = vmatpush1.xpose.msra.mxu0 0.0
      %521 = vmatprep.subr.mxu0 0.0
      %522 = vmatpush1.xpose.msra.mxu0 0.0
      %523 = vmatprep.subr.mxu0 0.0
      %524 = vmatpush1.xpose.msra.mxu0 0.0
      %525 = vmatprep.subr.mxu0 0.0
      %526 = vmatpush1.xpose.msra.mxu0 0.0
      %527 = vmatprep.subr.mxu0 0.0
      %528 = vmatpush1.xpose.msra.mxu0 0.0
      %529 = vmatprep.subr.mxu0 0.0
      %530 = vmatpush1.xpose.msra.mxu0 0.0
      %531 = vmatprep.mubr.f32.mxu0 0.0
      %532 = vmatmul.mubr.f32.gmra.mrb[0].mxu0 %v462
      %v533 = vpop.f32.mrb[0].mxu0
      %v534 = vadd.f32 0.0, %v533
      %v535 = vpop.f32.mrb[0].mxu0
      %536 = vdwg.mxu0
      %v538 = vsel %vm308, %v303, 0
      %v541 = vsel %vm308, %v307, 0
      %543 = vmatprep.subr.mxu0 0.0
      %544 = vmatpush1.xpose.msra.mxu0 %v541
      %545 = vmatprep.subr.mxu0 0.0
      %546 = vmatpush1.xpose.msra.mxu0 0.0
      %547 = vmatprep.subr.mxu0 0.0
      %548 = vmatpush1.xpose.msra.mxu0 0.0
      %549 = vmatprep.subr.mxu0 0.0
      %550 = vmatpush1.xpose.msra.mxu0 0.0
      %551 = vmatprep.subr.mxu0 0.0
      %552 = vmatpush1.xpose.msra.mxu0 0.0
      %553 = vmatprep.subr.mxu0 0.0
      %554 = vmatpush1.xpose.msra.mxu0 0.0
      %555 = vmatprep.subr.mxu0 0.0
      %556 = vmatpush1.xpose.msra.mxu0 0.0
      %557 = vmatprep.subr.mxu0 0.0
      %558 = vmatpush1.xpose.msra.mxu0 0.0
      %559 = vmatprep.subr.mxu0 0.0
      %560 = vmatpush1.xpose.msra.mxu0 0.0
      %561 = vmatprep.subr.mxu0 0.0
      %562 = vmatpush1.xpose.msra.mxu0 0.0
      %563 = vmatprep.subr.mxu0 0.0
      %564 = vmatpush1.xpose.msra.mxu0 0.0
      %565 = vmatprep.subr.mxu0 0.0
      %566 = vmatpush1.xpose.msra.mxu0 0.0
      %567 = vmatprep.subr.mxu0 0.0
      %568 = vmatpush1.xpose.msra.mxu0 0.0
      %569 = vmatprep.subr.mxu0 0.0
      %570 = vmatpush1.xpose.msra.mxu0 0.0
      %571 = vmatprep.subr.mxu0 0.0
      %572 = vmatpush1.xpose.msra.mxu0 0.0
      %573 = vmatprep.subr.mxu0 0.0
      %574 = vmatpush1.xpose.msra.mxu0 0.0
      %575 = vmatprep.subr.mxu0 0.0
      %576 = vmatpush1.xpose.msra.mxu0 0.0
      %577 = vmatprep.subr.mxu0 0.0
      %578 = vmatpush1.xpose.msra.mxu0 0.0
      %579 = vmatprep.subr.mxu0 0.0
      %580 = vmatpush1.xpose.msra.mxu0 0.0
      %581 = vmatprep.subr.mxu0 0.0
      %582 = vmatpush1.xpose.msra.mxu0 0.0
      %583 = vmatprep.subr.mxu0 0.0
      %584 = vmatpush1.xpose.msra.mxu0 0.0
      %585 = vmatprep.subr.mxu0 0.0
      %586 = vmatpush1.xpose.msra.mxu0 0.0
      %587 = vmatprep.subr.mxu0 0.0
      %588 = vmatpush1.xpose.msra.mxu0 0.0
      %589 = vmatprep.subr.mxu0 0.0
      %590 = vmatpush1.xpose.msra.mxu0 0.0
      %591 = vmatprep.subr.mxu0 0.0
      %592 = vmatpush1.xpose.msra.mxu0 0.0
      %593 = vmatprep.subr.mxu0 0.0
      %594 = vmatpush1.xpose.msra.mxu0 0.0
      %595 = vmatprep.subr.mxu0 0.0
      %596 = vmatpush1.xpose.msra.mxu0 0.0
      %597 = vmatprep.subr.mxu0 0.0
      %598 = vmatpush1.xpose.msra.mxu0 0.0
      %599 = vmatprep.subr.mxu0 0.0
      %600 = vmatpush1.xpose.msra.mxu0 0.0
      %601 = vmatprep.subr.mxu0 0.0
      %602 = vmatpush1.xpose.msra.mxu0 0.0
      %603 = vmatprep.subr.mxu0 0.0
      %604 = vmatpush1.xpose.msra.mxu0 0.0
      %605 = vmatprep.subr.mxu0 0.0
      %606 = vmatpush1.xpose.msra.mxu0 0.0
      %607 = vmatprep.mubr.f32.mxu0 0.0
      %608 = vmatmul.mubr.f32.gmra.mrb[0].mxu0 %v538
      %v609 = vpop.f32.mrb[0].mxu0
      %v610 = vadd.f32 0.0, %v609
      %v611 = vpop.f32.mrb[0].mxu0
      %612 = vdwg.mxu0
      %v613 = vld [vmem:[#allocation2] sm:$0xff]
      %v614 = vld [vmem:[#allocation2 + $0x8] sm:$0xff]
      %v615 = vld [vmem:[#allocation2 + $0x10] sm:$0xff]
      %v616 = vld [vmem:[#allocation2 + $0x18] sm:$0xff]
      %v617 = vsel %vm308, %v382, -inf
      %618 = vmax.xlane.f32.xlu0 %v617
      %v619 = vpop.xlane.xlu0 %618
      %v620 = vsel %vm308, %v458, -inf
      %621 = vmax.xlane.f32.xlu0 %v620
      %v622 = vpop.xlane.xlu0 %621
      %v623 = vsel %vm308, %v534, -inf
      %624 = vmax.xlane.f32.xlu0 %v623
      %v625 = vpop.xlane.xlu0 %624
      %v626 = vsel %vm308, %v610, -inf
      %627 = vmax.xlane.f32.xlu0 %v626
      %v628 = vpop.xlane.xlu0 %627
      %v629 = vmax.f32 %v613, %v619
      %v630 = vmax.f32 %v614, %v622
      %v631 = vmax.f32 %v615, %v625
      %v632 = vmax.f32 %v616, %v628
      %v633 = vsub.f32 %v613, %v629
      %v634 = vsub.f32 %v614, %v630
      %v635 = vsub.f32 %v615, %v631
      %v636 = vsub.f32 %v616, %v632
      %v637 = vmul.f32 %v633, 1.442695
      %v638 = vpow.pop %v637
      %v639 = vmul.f32 %v634, 1.442695
      %v640 = vpow.pop %v639
      %v641 = vmul.f32 %v635, 1.442695
      %v642 = vpow.pop %v641
      %v643 = vmul.f32 %v636, 1.442695
      %v644 = vpow.pop %v643
      %646 = vset.pattern.permute.xlu0 0
      %647 = vperm.xlu0 %646, %v629
      %v648 = vpop.permute.xlu0 %647
      %651 = vset.pattern.permute.xlu0 0
      %652 = vperm.xlu0 %651, %v630
      %v653 = vpop.permute.xlu0 %652
      %656 = vset.pattern.permute.xlu0 0
      %657 = vperm.xlu0 %656, %v631
      %v658 = vpop.permute.xlu0 %657
      %661 = vset.pattern.permute.xlu0 0
      %662 = vperm.xlu0 %661, %v632
      %v663 = vpop.permute.xlu0 %662
      %v665 = vsub.f32 %v382, %v648
      %v666 = vsub.f32 %v458, %v653
      %v667 = vsub.f32 %v534, %v658
      %v668 = vsub.f32 %v610, %v663
      %v669 = vmul.f32 %v665, 1.442695
      %v670 = vpow.pop %v669
      %v671 = vmul.f32 %v666, 1.442695
      %v672 = vpow.pop %v671
      %v673 = vmul.f32 %v667, 1.442695
      %v674 = vpow.pop %v673
      %v675 = vmul.f32 %v668, 1.442695
      %v676 = vpow.pop %v675
      %v677 = vld [vmem:[#allocation3] sm:$0xff]
      %v678 = vld [vmem:[#allocation3 + $0x8] sm:$0xff]
      %v679 = vld [vmem:[#allocation3 + $0x10] sm:$0xff]
      %v680 = vld [vmem:[#allocation3 + $0x18] sm:$0xff]
      %v681 = vmul.f32 %v638, %v677
      %v682 = vmul.f32 %v640, %v678
      %v683 = vmul.f32 %v642, %v679
      %v684 = vmul.f32 %v644, %v680
      %v685 = vsel %vm308, %v670, 0.0
      %686 = vadd.xlane.f32.xlu0 %v685
      %v687 = vpop.xlane.xlu0 %686
      %v688 = vsel %vm308, %v672, 0.0
      %689 = vadd.xlane.f32.xlu0 %v688
      %v690 = vpop.xlane.xlu0 %689
      %v691 = vsel %vm308, %v674, 0.0
      %692 = vadd.xlane.f32.xlu0 %v691
      %v693 = vpop.xlane.xlu0 %692
      %v694 = vsel %vm308, %v676, 0.0
      %695 = vadd.xlane.f32.xlu0 %v694
      %v696 = vpop.xlane.xlu0 %695
      %v697 = vadd.f32 %v681, %v687
      %v698 = vadd.f32 %v682, %v690
      %v699 = vadd.f32 %v683, %v693
      %v700 = vadd.f32 %v684, %v696
      %vm701 = vcmask 7168
      %702 = vst.msk [vmem:[#allocation3] sm:$0xff] %vm701, %v697
      %703 = vst.msk [vmem:[#allocation3 + $0x8] sm:$0xff] %vm701, %v698
      %704 = vst.msk [vmem:[#allocation3 + $0x10] sm:$0xff] %vm701, %v699
      %705 = vst.msk [vmem:[#allocation3 + $0x18] sm:$0xff] %vm701, %v700
      %v706 = vld [vmem:[#allocation4] sm:$0xff]
      %v707 = vld [vmem:[#allocation4 + $0x8] sm:$0xff]
      %v708 = vld [vmem:[#allocation4 + $0x10] sm:$0xff]
      %v709 = vld [vmem:[#allocation4 + $0x18] sm:$0xff]
      %711 = vset.pattern.permute.xlu0 0
      %712 = vperm.xlu0 %711, %v638
      %v713 = vpop.permute.xlu0 %712
      %716 = vset.pattern.permute.xlu0 0
      %717 = vperm.xlu0 %716, %v640
      %v718 = vpop.permute.xlu0 %717
      %721 = vset.pattern.permute.xlu0 0
      %722 = vperm.xlu0 %721, %v642
      %v723 = vpop.permute.xlu0 %722
      %726 = vset.pattern.permute.xlu0 0
      %727 = vperm.xlu0 %726, %v644
      %v728 = vpop.permute.xlu0 %727
      %v730 = vmul.f32 %v713, %v706
      %v731 = vmul.f32 %v718, %v707
      %v732 = vmul.f32 %v723, %v708
      %v733 = vmul.f32 %v728, %v709
      %v734 = vld [vmem:[%s267] sm:$0xff]
      %v735 = vld [vmem:[%s267 + $0x8] sm:$0xff]
      %v736 = vld [vmem:[%s267 + $0x10] sm:$0xff]
      %v737 = vld [vmem:[%s267 + $0x18] sm:$0xff]
      %v739 = vsel %vm308, %v670, 0
      %741 = vmatprep.subr.mxu0 0.0
      %742 = vmatpush1.msra.mxu0 %v734
      %743 = vmatprep.subr.mxu0 0.0
      %744 = vmatpush1.msra.mxu0 0.0
      %745 = vmatprep.subr.mxu0 0.0
      %746 = vmatpush1.msra.mxu0 0.0
      %747 = vmatprep.subr.mxu0 0.0
      %748 = vmatpush1.msra.mxu0 0.0
      %749 = vmatprep.subr.mxu0 0.0
      %750 = vmatpush1.msra.mxu0 0.0
      %751 = vmatprep.subr.mxu0 0.0
      %752 = vmatpush1.msra.mxu0 0.0
      %753 = vmatprep.subr.mxu0 0.0
      %754 = vmatpush1.msra.mxu0 0.0
      %755 = vmatprep.subr.mxu0 0.0
      %756 = vmatpush1.msra.mxu0 0.0
      %757 = vmatprep.subr.mxu0 0.0
      %758 = vmatpush1.msra.mxu0 0.0
      %759 = vmatprep.subr.mxu0 0.0
      %760 = vmatpush1.msra.mxu0 0.0
      %761 = vmatprep.subr.mxu0 0.0
      %762 = vmatpush1.msra.mxu0 0.0
      %763 = vmatprep.subr.mxu0 0.0
      %764 = vmatpush1.msra.mxu0 0.0
      %765 = vmatprep.subr.mxu0 0.0
      %766 = vmatpush1.msra.mxu0 0.0
      %767 = vmatprep.subr.mxu0 0.0
      %768 = vmatpush1.msra.mxu0 0.0
      %769 = vmatprep.subr.mxu0 0.0
      %770 = vmatpush1.msra.mxu0 0.0
      %771 = vmatprep.subr.mxu0 0.0
      %772 = vmatpush1.msra.mxu0 0.0
      %773 = vmatprep.subr.mxu0 0.0
      %774 = vmatpush1.msra.mxu0 0.0
      %775 = vmatprep.subr.mxu0 0.0
      %776 = vmatpush1.msra.mxu0 0.0
      %777 = vmatprep.subr.mxu0 0.0
      %778 = vmatpush1.msra.mxu0 0.0
      %779 = vmatprep.subr.mxu0 0.0
      %780 = vmatpush1.msra.mxu0 0.0
      %781 = vmatprep.subr.mxu0 0.0
      %782 = vmatpush1.msra.mxu0 0.0
      %783 = vmatprep.subr.mxu0 0.0
      %784 = vmatpush1.msra.mxu0 0.0
      %785 = vmatprep.subr.mxu0 0.0
      %786 = vmatpush1.msra.mxu0 0.0
      %787 = vmatprep.subr.mxu0 0.0
      %788 = vmatpush1.msra.mxu0 0.0
      %789 = vmatprep.subr.mxu0 0.0
      %790 = vmatpush1.msra.mxu0 0.0
      %791 = vmatprep.subr.mxu0 0.0
      %792 = vmatpush1.msra.mxu0 0.0
      %793 = vmatprep.subr.mxu0 0.0
      %794 = vmatpush1.msra.mxu0 0.0
      %795 = vmatprep.subr.mxu0 0.0
      %796 = vmatpush1.msra.mxu0 0.0
      %797 = vmatprep.subr.mxu0 0.0
      %798 = vmatpush1.msra.mxu0 0.0
      %799 = vmatprep.subr.mxu0 0.0
      %800 = vmatpush1.msra.mxu0 0.0
      %801 = vmatprep.subr.mxu0 0.0
      %802 = vmatpush1.msra.mxu0 0.0
      %803 = vmatprep.subr.mxu0 0.0
      %804 = vmatpush1.msra.mxu0 0.0
      %805 = vmatprep.mubr.f32.mxu0 0.0
      %806 = vmatmul.mubr.f32.gmra.mrb[0].mxu0 %v739
      %v807 = vpop.f32.mrb[0].mxu0
      %v808 = vadd.f32 0.0, %v807
      %v809 = vpop.f32.mrb[0].mxu0
      %810 = vdwg.mxu0
      %v812 = vsel %vm308, %v672, 0
      %814 = vmatprep.subr.mxu0 0.0
      %815 = vmatpush1.msra.mxu0 %v735
      %816 = vmatprep.subr.mxu0 0.0
      %817 = vmatpush1.msra.mxu0 0.0
      %818 = vmatprep.subr.mxu0 0.0
      %819 = vmatpush1.msra.mxu0 0.0
      %820 = vmatprep.subr.mxu0 0.0
      %821 = vmatpush1.msra.mxu0 0.0
      %822 = vmatprep.subr.mxu0 0.0
      %823 = vmatpush1.msra.mxu0 0.0
      %824 = vmatprep.subr.mxu0 0.0
      %825 = vmatpush1.msra.mxu0 0.0
      %826 = vmatprep.subr.mxu0 0.0
      %827 = vmatpush1.msra.mxu0 0.0
      %828 = vmatprep.subr.mxu0 0.0
      %829 = vmatpush1.msra.mxu0 0.0
      %830 = vmatprep.subr.mxu0 0.0
      %831 = vmatpush1.msra.mxu0 0.0
      %832 = vmatprep.subr.mxu0 0.0
      %833 = vmatpush1.msra.mxu0 0.0
      %834 = vmatprep.subr.mxu0 0.0
      %835 = vmatpush1.msra.mxu0 0.0
      %836 = vmatprep.subr.mxu0 0.0
      %837 = vmatpush1.msra.mxu0 0.0
      %838 = vmatprep.subr.mxu0 0.0
      %839 = vmatpush1.msra.mxu0 0.0
      %840 = vmatprep.subr.mxu0 0.0
      %841 = vmatpush1.msra.mxu0 0.0
      %842 = vmatprep.subr.mxu0 0.0
      %843 = vmatpush1.msra.mxu0 0.0
      %844 = vmatprep.subr.mxu0 0.0
      %845 = vmatpush1.msra.mxu0 0.0
      %846 = vmatprep.subr.mxu0 0.0
      %847 = vmatpush1.msra.mxu0 0.0
      %848 = vmatprep.subr.mxu0 0.0
      %849 = vmatpush1.msra.mxu0 0.0
      %850 = vmatprep.subr.mxu0 0.0
      %851 = vmatpush1.msra.mxu0 0.0
      %852 = vmatprep.subr.mxu0 0.0
      %853 = vmatpush1.msra.mxu0 0.0
      %854 = vmatprep.subr.mxu0 0.0
      %855 = vmatpush1.msra.mxu0 0.0
      %856 = vmatprep.subr.mxu0 0.0
      %857 = vmatpush1.msra.mxu0 0.0
      %858 = vmatprep.subr.mxu0 0.0
      %859 = vmatpush1.msra.mxu0 0.0
      %860 = vmatprep.subr.mxu0 0.0
      %861 = vmatpush1.msra.mxu0 0.0
      %862 = vmatprep.subr.mxu0 0.0
      %863 = vmatpush1.msra.mxu0 0.0
      %864 = vmatprep.subr.mxu0 0.0
      %865 = vmatpush1.msra.mxu0 0.0
      %866 = vmatprep.subr.mxu0 0.0
      %867 = vmatpush1.msra.mxu0 0.0
      %868 = vmatprep.subr.mxu0 0.0
      %869 = vmatpush1.msra.mxu0 0.0
      %870 = vmatprep.subr.mxu0 0.0
      %871 = vmatpush1.msra.mxu0 0.0
      %872 = vmatprep.subr.mxu0 0.0
      %873 = vmatpush1.msra.mxu0 0.0
      %874 = vmatprep.subr.mxu0 0.0
      %875 = vmatpush1.msra.mxu0 0.0
      %876 = vmatprep.subr.mxu0 0.0
      %877 = vmatpush1.msra.mxu0 0.0
      %878 = vmatprep.mubr.f32.mxu0 0.0
      %879 = vmatmul.mubr.f32.gmra.mrb[0].mxu0 %v812
      %v880 = vpop.f32.mrb[0].mxu0
      %v881 = vadd.f32 0.0, %v880
      %v882 = vpop.f32.mrb[0].mxu0
      %883 = vdwg.mxu0
      %v885 = vsel %vm308, %v674, 0
      %887 = vmatprep.subr.mxu0 0.0
      %888 = vmatpush1.msra.mxu0 %v736
      %889 = vmatprep.subr.mxu0 0.0
      %890 = vmatpush1.msra.mxu0 0.0
      %891 = vmatprep.subr.mxu0 0.0
      %892 = vmatpush1.msra.mxu0 0.0
      %893 = vmatprep.subr.mxu0 0.0
      %894 = vmatpush1.msra.mxu0 0.0
      %895 = vmatprep.subr.mxu0 0.0
      %896 = vmatpush1.msra.mxu0 0.0
      %897 = vmatprep.subr.mxu0 0.0
      %898 = vmatpush1.msra.mxu0 0.0
      %899 = vmatprep.subr.mxu0 0.0
      %900 = vmatpush1.msra.mxu0 0.0
      %901 = vmatprep.subr.mxu0 0.0
      %902 = vmatpush1.msra.mxu0 0.0
      %903 = vmatprep.subr.mxu0 0.0
      %904 = vmatpush1.msra.mxu0 0.0
      %905 = vmatprep.subr.mxu0 0.0
      %906 = vmatpush1.msra.mxu0 0.0
      %907 = vmatprep.subr.mxu0 0.0
      %908 = vmatpush1.msra.mxu0 0.0
      %909 = vmatprep.subr.mxu0 0.0
      %910 = vmatpush1.msra.mxu0 0.0
      %911 = vmatprep.subr.mxu0 0.0
      %912 = vmatpush1.msra.mxu0 0.0
      %913 = vmatprep.subr.mxu0 0.0
      %914 = vmatpush1.msra.mxu0 0.0
      %915 = vmatprep.subr.mxu0 0.0
      %916 = vmatpush1.msra.mxu0 0.0
      %917 = vmatprep.subr.mxu0 0.0
      %918 = vmatpush1.msra.mxu0 0.0
      %919 = vmatprep.subr.mxu0 0.0
      %920 = vmatpush1.msra.mxu0 0.0
      %921 = vmatprep.subr.mxu0 0.0
      %922 = vmatpush1.msra.mxu0 0.0
      %923 = vmatprep.subr.mxu0 0.0
      %924 = vmatpush1.msra.mxu0 0.0
      %925 = vmatprep.subr.mxu0 0.0
      %926 = vmatpush1.msra.mxu0 0.0
      %927 = vmatprep.subr.mxu0 0.0
      %928 = vmatpush1.msra.mxu0 0.0
      %929 = vmatprep.subr.mxu0 0.0
      %930 = vmatpush1.msra.mxu0 0.0
      %931 = vmatprep.subr.mxu0 0.0
      %932 = vmatpush1.msra.mxu0 0.0
      %933 = vmatprep.subr.mxu0 0.0
      %934 = vmatpush1.msra.mxu0 0.0
      %935 = vmatprep.subr.mxu0 0.0
      %936 = vmatpush1.msra.mxu0 0.0
      %937 = vmatprep.subr.mxu0 0.0
      %938 = vmatpush1.msra.mxu0 0.0
      %939 = vmatprep.subr.mxu0 0.0
      %940 = vmatpush1.msra.mxu0 0.0
      %941 = vmatprep.subr.mxu0 0.0
      %942 = vmatpush1.msra.mxu0 0.0
      %943 = vmatprep.subr.mxu0 0.0
      %944 = vmatpush1.msra.mxu0 0.0
      %945 = vmatprep.subr.mxu0 0.0
      %946 = vmatpush1.msra.mxu0 0.0
      %947 = vmatprep.subr.mxu0 0.0
      %948 = vmatpush1.msra.mxu0 0.0
      %949 = vmatprep.subr.mxu0 0.0
      %950 = vmatpush1.msra.mxu0 0.0
      %951 = vmatprep.mubr.f32.mxu0 0.0
      %952 = vmatmul.mubr.f32.gmra.mrb[0].mxu0 %v885
      %v953 = vpop.f32.mrb[0].mxu0
      %v954 = vadd.f32 0.0, %v953
      %v955 = vpop.f32.mrb[0].mxu0
      %956 = vdwg.mxu0
      %v958 = vsel %vm308, %v676, 0
      %960 = vmatprep.subr.mxu0 0.0
      %961 = vmatpush1.msra.mxu0 %v737
      %962 = vmatprep.subr.mxu0 0.0
      %963 = vmatpush1.msra.mxu0 0.0
      %964 = vmatprep.subr.mxu0 0.0
      %965 = vmatpush1.msra.mxu0 0.0
      %966 = vmatprep.subr.mxu0 0.0
      %967 = vmatpush1.msra.mxu0 0.0
      %968 = vmatprep.subr.mxu0 0.0
      %969 = vmatpush1.msra.mxu0 0.0
      %970 = vmatprep.subr.mxu0 0.0
      %971 = vmatpush1.msra.mxu0 0.0
      %972 = vmatprep.subr.mxu0 0.0
      %973 = vmatpush1.msra.mxu0 0.0
      %974 = vmatprep.subr.mxu0 0.0
      %975 = vmatpush1.msra.mxu0 0.0
      %976 = vmatprep.subr.mxu0 0.0
      %977 = vmatpush1.msra.mxu0 0.0
      %978 = vmatprep.subr.mxu0 0.0
      %979 = vmatpush1.msra.mxu0 0.0
      %980 = vmatprep.subr.mxu0 0.0
      %981 = vmatpush1.msra.mxu0 0.0
      %982 = vmatprep.subr.mxu0 0.0
      %983 = vmatpush1.msra.mxu0 0.0
      %984 = vmatprep.subr.mxu0 0.0
      %985 = vmatpush1.msra.mxu0 0.0
      %986 = vmatprep.subr.mxu0 0.0
      %987 = vmatpush1.msra.mxu0 0.0
      %988 = vmatprep.subr.mxu0 0.0
      %989 = vmatpush1.msra.mxu0 0.0
      %990 = vmatprep.subr.mxu0 0.0
      %991 = vmatpush1.msra.mxu0 0.0
      %992 = vmatprep.subr.mxu0 0.0
      %993 = vmatpush1.msra.mxu0 0.0
      %994 = vmatprep.subr.mxu0 0.0
      %995 = vmatpush1.msra.mxu0 0.0
      %996 = vmatprep.subr.mxu0 0.0
      %997 = vmatpush1.msra.mxu0 0.0
      %998 = vmatprep.subr.mxu0 0.0
      %999 = vmatpush1.msra.mxu0 0.0
      %1000 = vmatprep.subr.mxu0 0.0
      %1001 = vmatpush1.msra.mxu0 0.0
      %1002 = vmatprep.subr.mxu0 0.0
      %1003 = vmatpush1.msra.mxu0 0.0
      %1004 = vmatprep.subr.mxu0 0.0
      %1005 = vmatpush1.msra.mxu0 0.0
      %1006 = vmatprep.subr.mxu0 0.0
      %1007 = vmatpush1.msra.mxu0 0.0
      %1008 = vmatprep.subr.mxu0 0.0
      %1009 = vmatpush1.msra.mxu0 0.0
      %1010 = vmatprep.subr.mxu0 0.0
      %1011 = vmatpush1.msra.mxu0 0.0
      %1012 = vmatprep.subr.mxu0 0.0
      %1013 = vmatpush1.msra.mxu0 0.0
      %1014 = vmatprep.subr.mxu0 0.0
      %1015 = vmatpush1.msra.mxu0 0.0
      %1016 = vmatprep.subr.mxu0 0.0
      %1017 = vmatpush1.msra.mxu0 0.0
      %1018 = vmatprep.subr.mxu0 0.0
      %1019 = vmatpush1.msra.mxu0 0.0
      %1020 = vmatprep.subr.mxu0 0.0
      %1021 = vmatpush1.msra.mxu0 0.0
      %1022 = vmatprep.subr.mxu0 0.0
      %1023 = vmatpush1.msra.mxu0 0.0
      %1024 = vmatprep.mubr.f32.mxu0 0.0
      %1025 = vmatmul.mubr.f32.gmra.mrb[0].mxu0 %v958
      %v1026 = vpop.f32.mrb[0].mxu0
      %v1027 = vadd.f32 0.0, %v1026
      %v1028 = vpop.f32.mrb[0].mxu0
      %1029 = vdwg.mxu0
      %v1030 = vadd.f32 %v730, %v808
      %v1031 = vadd.f32 %v731, %v881
      %v1032 = vadd.f32 %v732, %v954
      %v1033 = vadd.f32 %v733, %v1027
      %1034 = vst.msk [vmem:[#allocation4] sm:$0xff] %vm308, %v1030
      %1035 = vst.msk [vmem:[#allocation4 + $0x8] sm:$0xff] %vm308, %v1031
      %1036 = vst.msk [vmem:[#allocation4 + $0x10] sm:$0xff] %vm308, %v1032
      %1037 = vst.msk [vmem:[#allocation4 + $0x18] sm:$0xff] %vm308, %v1033
      %1038 = vst.msk [vmem:[#allocation2] sm:$0xff] %vm701, %v629
      %1039 = vst.msk [vmem:[#allocation2 + $0x8] sm:$0xff] %vm701, %v630
      %1040 = vst.msk [vmem:[#allocation2 + $0x10] sm:$0xff] %vm701, %v631
      %1041 = vst.msk [vmem:[#allocation2 + $0x18] sm:$0xff] %vm701, %v632
      // Predicated region
      $region37: #{self_attention_forward.4} parent=31 // pred_check
        %p1042 = pneg %p278
      $region38: #{self_attention_forward.4} parent=31 // pred_check_branch
        %1044 = sbr.rel (%p1042) target = $region40
      $region39: #{self_attention_forward.4} parent=31 // pred_region
        %v1045 = vld [vmem:[#allocation3] sm:$0xff]
        %v1046 = vld [vmem:[#allocation3 + $0x8] sm:$0xff]
        %v1047 = vld [vmem:[#allocation3 + $0x10] sm:$0xff]
        %v1048 = vld [vmem:[#allocation3 + $0x18] sm:$0xff]
        %v1049 = vrcp.pop %v1045
        %v1050 = vrcp.pop %v1046
        %v1051 = vrcp.pop %v1047
        %v1052 = vrcp.pop %v1048
        %v1053 = vld [vmem:[#allocation4] sm:$0xff]
        %v1054 = vld [vmem:[#allocation4 + $0x8] sm:$0xff]
        %v1055 = vld [vmem:[#allocation4 + $0x10] sm:$0xff]
        %v1056 = vld [vmem:[#allocation4 + $0x18] sm:$0xff]
        %1058 = vset.pattern.permute.xlu0 0
        %1059 = vperm.xlu0 %1058, %v1049
        %v1060 = vpop.permute.xlu0 %1059
        %1063 = vset.pattern.permute.xlu0 0
        %1064 = vperm.xlu0 %1063, %v1050
        %v1065 = vpop.permute.xlu0 %1064
        %1068 = vset.pattern.permute.xlu0 0
        %1069 = vperm.xlu0 %1068, %v1051
        %v1070 = vpop.permute.xlu0 %1069
        %1073 = vset.pattern.permute.xlu0 0
        %1074 = vperm.xlu0 %1073, %v1052
        %v1075 = vpop.permute.xlu0 %1074
        %v1077 = vmul.f32 %v1053, %v1060
        %v1078 = vmul.f32 %v1054, %v1065
        %v1079 = vmul.f32 %v1055, %v1070
        %v1080 = vmul.f32 %v1056, %v1075
        %1081 = vst.msk [vmem:[%s276] sm:$0xff] %vm308, %v1077
        %1082 = vst.msk [vmem:[%s276 + $0x8] sm:$0xff] %vm308, %v1078
        %1083 = vst.msk [vmem:[%s276 + $0x10] sm:$0xff] %vm308, %v1079
        %1084 = vst.msk [vmem:[%s276 + $0x18] sm:$0xff] %vm308, %v1080
      $region40: #{self_attention_forward.4} parent=31 // pred_fallthru
        _
      %s1085 = smul.u32 4, %s19
      %p1086 = scmp.lt.s32.totalorder %s1085, 7
      %s1087 = scalar_select %p1086, %s1085, 7
      %p1088 = scmp.lt.s32.totalorder %s20, 0
      %s1089 = scalar_select %p1088, %s20, 0
      %s1090 = sadd.s32 %s1089, %s1087
      %s1091 = smul.addr %s1090, 8
      %s1092 = scalar_lea.vmem %s3, %s1091
      // Predicated region
      $region41: #{self_attention_forward.4} parent=31 // pred_check
        %p1093 = pneg %p137
      $region42: #{self_attention_forward.4} parent=31 // pred_check_branch
        %1095 = sbr.rel (%p1093) target = $region44
      $region43: #{self_attention_forward.4} parent=31 // pred_region
        %s1096 = smul.u32 4, %s19
      $region44: #{self_attention_forward.4} parent=31 // pred_fallthru
        _
    $region32: #{self_attention_forward.4} parent=5 // pred_fallthru
      _
    %p1097 = scmp.le.s32.totalorder 2, %s9
    // Predicated region
    $region45: #{self_attention_forward.4} parent=5 // pred_check
      %p1098 = pneg %p1097
    $region46: #{self_attention_forward.4} parent=5 // pred_check_branch
      %1100 = sbr.rel (%p1098) target = $region48
    $region47: #{self_attention_forward.4} parent=5 // pred_region
      %s1101 = ssub.s32 %s9, 2
      // Predicated region
      $region49: #{self_attention_forward.4} parent=47 // pred_check
        %p1102 = pneg %p143
      $region50: #{self_attention_forward.4} parent=47 // pred_check_branch
        %1104 = sbr.rel (%p1102) target = $region52
      $region51: #{self_attention_forward.4} parent=47 // pred_region
        %s1105 = smul.u32 4, %s22
        %p1106 = scmp.lt.s32.totalorder %s1105, 7
        %s1107 = scalar_select %p1106, %s1105, 7
        %p1108 = scmp.lt.s32.totalorder %s23, 0
        %s1109 = scalar_select %p1108, %s23, 0
        %s1110 = sadd.s32 %s1109, %s1107
        %s1111 = smul.addr %s1110, 8
        %s1112 = scalar_lea.vmem %s3, %s1111
      $region52: #{self_attention_forward.4} parent=47 // pred_fallthru
        _
    $region48: #{self_attention_forward.4} parent=5 // pred_fallthru
      _
  $region6: #{self_attention_forward.4} parent=0 // loop_footer
    %s13 = sadd.s32 1, %s9
  $region7: #{self_attention_forward.4} parent=0 // loop_footer_branch
    %8 = sbr.rel target = $region3
  $region8: #{self_attention_forward.4} parent=0 // loop_exit
    _

</llo_original>
